<compile_context>
chip_gen: v7x
topology: tpu7x:2x2x1
jax: 0.10.0
libtpu: 0.0.40
codegen_flags: <defaults>
</compile_context>

<pallas_src>
import jax
import jax.numpy as jnp
import numpy as np
from jax.experimental import pallas as pl
from jax.experimental.pallas import tpu as pltpu

# ---------------- static configuration (small, module-consistent) ------------
B = 8          # batch
CIN = 3        # image channels
H = W = 16     # spatial
COUT = 16      # backbone conv channels (stand-in backbone)
D = 512        # out_dim == feat_dim (forced by primary.expand in extract_feature)
COLORS = 3     # args.color
BN_EPS = 1e-5  # nn.BatchNorm1d default


# ------------------------------ Pallas kernel --------------------------------
def cdnet_kernel(z_ref, decw_ref, decb_ref, gamma_ref, beta_ref, prelu_ref,
                 wnx_ref, wnp_ref, wnb_ref, dex_ref):
    """CDNet decomposition loop. All operands are whole-array VMEM residents."""
    cur = z_ref[...]                                   # (B, D) f32
    # dec_w arrives as bf16 (halved DMA); upcast once, outside the colors loop.
    decw = decw_ref[...].astype(jnp.float32)           # (D, D)
    decb = decb_ref[...]                               # (1, D)
    gamma = gamma_ref[...]                             # (1, D)  BN weight
    beta = beta_ref[...]                               # (1, D)  BN bias
    a = prelu_ref[...]                                 # (1, 1)  PReLU slope
    wnx = wnx_ref[...]                                 # (D, 1)  WeightNet (x half)
    wnp = wnp_ref[...]                                 # (D, 1)  WeightNet (primary half)
    wnb = wnb_ref[...]                                 # (1, 1)

    inv_b = jnp.float32(1.0 / B)
    for _ in range(COLORS):                            # unrolled at trace time
        # decomposition = Linear -> BatchNorm1d (training: batch stats) -> PReLU
        lin = jnp.dot(cur, decw, preferred_element_type=jnp.float32) + decb
        # One-pass BN statistics: var = E[x^2] - mu^2 (fused sums).
        mu = jnp.sum(lin, axis=0, keepdims=True) * inv_b
        ex2 = jnp.sum(lin * lin, axis=0, keepdims=True) * inv_b
        var = ex2 - mu * mu
        bn = (lin - mu) * jax.lax.rsqrt(var + BN_EPS) * gamma + beta
        primary = jnp.where(bn >= 0.0, bn, a * bn)     # PReLU (single param)

        # WeightNet(concat([cur, primary])) as two MXU mat-vecs (split weights).
        s = (jnp.dot(cur, wnx, preferred_element_type=jnp.float32)
             + jnp.dot(primary, wnp, preferred_element_type=jnp.float32)
             + wnb)                                    # (B, 1)
        weight = jax.nn.sigmoid(s)

        cur = cur - primary * weight

    dex_ref[...] = cur                                 # de_x, lane-dense (B, D)


# --------------------------- stand-in backbone (XLA) --------------------------
def backbone_forward(x_nchw, p):
    # TODO(synk): `self.net` (args.backbone) is not defined in the reference
    # snippet; a small conv3x3 -> ReLU -> GAP -> Linear stand-in computed in
    # plain XLA supplies z = net(x)[0] (hoisted out of the Pallas kernel per
    # the performance review).
    x = jnp.transpose(x_nchw, (0, 2, 3, 1)).astype(jnp.float32)     # NCHW -> NHWC
    fm = jax.lax.conv_general_dilated(
        x, p['conv_w'], window_strides=(1, 1), padding='SAME',
        dimension_numbers=('NHWC', 'HWIO', 'NHWC'))
    fm = jnp.maximum(fm + p['conv_b'].reshape(1, 1, 1, COUT), 0.0)  # ReLU
    pooled = fm.mean(axis=(1, 2))                                   # GAP (B, COUT)
    return pooled @ p['head_w'] + p['head_b']                       # (B, D)


# ------------------------------- wrapper --------------------------------------
def cdnet_forward(x_nchw, p):
    z = backbone_forward(x_nchw, p)                    # (B, D) f32, plain XLA

    args = (z, p['dec_w'], p['dec_b'], p['bn_gamma'], p['bn_beta'], p['prelu_a'],
            p['wn_wx'], p['wn_wp'], p['wn_b'])
    vmem = lambda: pl.BlockSpec(memory_space=pltpu.MemorySpace.VMEM)
    return pl.pallas_call(
        cdnet_kernel,
        out_shape=jax.ShapeDtypeStruct((B, D), jnp.float32),
        in_specs=[vmem() for _ in args],
        out_specs=vmem(),
        cost_estimate=pl.CostEstimate(
            flops=COLORS * (2 * B * D * D + 4 * B * D + 12 * B * D),
            transcendentals=COLORS * (D + B),
            bytes_accessed=D * D * 2 + 2 * B * D * 4 + 6 * D * 4),
    )(*args)


# -------------------------- deterministic parameters --------------------------
def init_params():
    key = jax.random.PRNGKey(0)
    k = jax.random.split(key, 6)
    return {
        'conv_w': (jax.random.normal(k[0], (3, 3, CIN, COUT), jnp.float32) * 0.1),
        'conv_b': jnp.zeros((COUT,), jnp.float32),
        'head_w': (jax.random.normal(k[1], (COUT, D), jnp.float32) * 0.1),
        'head_b': jnp.zeros((1, D), jnp.float32),
        # dec_w stored bf16: halves the dominant HBM->VMEM weight DMA; the
        # reference uses the same bf16-rounded weights (upcast to f32).
        'dec_w': (jax.random.normal(k[2], (D, D), jnp.float32)
                  / np.sqrt(D)).astype(jnp.bfloat16),
        'dec_b': jnp.zeros((1, D), jnp.float32),
        'bn_gamma': jnp.ones((1, D), jnp.float32),
        'bn_beta': jnp.zeros((1, D), jnp.float32),
        'prelu_a': jnp.full((1, 1), 0.25, jnp.float32),     # nn.PReLU() default
        # TODO(synk): WeightNet is not defined in the snippet; assumed
        # Linear(out_dim + feat_dim -> 1) + Sigmoid, stored as two (D, 1) halves.
        'wn_wx': (jax.random.normal(k[3], (D, 1), jnp.float32) * 0.05),
        'wn_wp': (jax.random.normal(k[4], (D, 1), jnp.float32) * 0.05),
        'wn_b': jnp.zeros((1, 1), jnp.float32),
    }


# ------------------------- pure-JAX reference (check) -------------------------
def reference_forward(x_nchw, p):
    cur = backbone_forward(x_nchw, p)
    decw = p['dec_w'].astype(jnp.float32)
    for _ in range(COLORS):
        lin = cur @ decw + p['dec_b']
        mu = lin.mean(0, keepdims=True)
        var = ((lin - mu) ** 2).mean(0, keepdims=True)          # two-pass BN stats
        bn = (lin - mu) * jax.lax.rsqrt(var + BN_EPS) * p['bn_gamma'] + p['bn_beta']
        primary = jnp.where(bn >= 0.0, bn, p['prelu_a'] * bn)
        s = cur @ p['wn_wx'] + primary @ p['wn_wp'] + p['wn_b']
        cur = cur - primary * jax.nn.sigmoid(s)
    return cur


if __name__ == "__main__":
    params = init_params()
    kx = jax.random.PRNGKey(0)
    x = jax.random.normal(kx, (B, CIN, H, W), jnp.float32)   # PyTorch-style NCHW input

    de_x = jax.jit(cdnet_forward)(x, params)
    jax.block_until_ready(de_x)

    ref = reference_forward(x, params)
    assert de_x.shape == (B, D), de_x.shape
    err = float(jnp.max(jnp.abs(de_x - ref)))
    assert err < 1e-2, f"max abs error {err}"
    print("KERNEL_OK")
</pallas_src>

<mosaic_0001>
module attributes {stable_mosaic.version = 11 : i64} {
  func.func @cdnet_kernel(%arg0: memref<8x512xf32, #tpu.memory_space<vmem>>, %arg1: memref<512x512xbf16, #tpu.memory_space<vmem>>, %arg2: memref<1x512xf32, #tpu.memory_space<vmem>>, %arg3: memref<1x512xf32, #tpu.memory_space<vmem>>, %arg4: memref<1x512xf32, #tpu.memory_space<vmem>>, %arg5: memref<1x1xf32, #tpu.memory_space<vmem>>, %arg6: memref<512x1xf32, #tpu.memory_space<vmem>>, %arg7: memref<512x1xf32, #tpu.memory_space<vmem>>, %arg8: memref<1x1xf32, #tpu.memory_space<vmem>>, %arg9: memref<8x512xf32, #tpu.memory_space<vmem>>) attributes {dimension_semantics = [], scalar_prefetch = 0 : i64, scratch_operands = 0 : i64, tpu.core_type = #tpu.core_type<tc>} {
    %c0 = arith.constant 0 : index
    %c0_0 = arith.constant 0 : index
    %0 = vector.load %arg0[%c0, %c0_0] : memref<8x512xf32, #tpu.memory_space<vmem>>, vector<8x512xf32>
    %c0_1 = arith.constant 0 : index
    %c0_2 = arith.constant 0 : index
    %1 = vector.load %arg1[%c0_1, %c0_2] : memref<512x512xbf16, #tpu.memory_space<vmem>>, vector<512x512xbf16>
    %2 = arith.extf %1 : vector<512x512xbf16> to vector<512x512xf32>
    %c0_3 = arith.constant 0 : index
    %c0_4 = arith.constant 0 : index
    %3 = vector.load %arg2[%c0_3, %c0_4] : memref<1x512xf32, #tpu.memory_space<vmem>>, vector<1x512xf32>
    %c0_5 = arith.constant 0 : index
    %c0_6 = arith.constant 0 : index
    %4 = vector.load %arg3[%c0_5, %c0_6] : memref<1x512xf32, #tpu.memory_space<vmem>>, vector<1x512xf32>
    %c0_7 = arith.constant 0 : index
    %c0_8 = arith.constant 0 : index
    %5 = vector.load %arg4[%c0_7, %c0_8] : memref<1x512xf32, #tpu.memory_space<vmem>>, vector<1x512xf32>
    %c0_9 = arith.constant 0 : index
    %c0_10 = arith.constant 0 : index
    %6 = vector.load %arg5[%c0_9, %c0_10] : memref<1x1xf32, #tpu.memory_space<vmem>>, vector<1x1xf32>
    %c0_11 = arith.constant 0 : index
    %c0_12 = arith.constant 0 : index
    %7 = vector.load %arg6[%c0_11, %c0_12] : memref<512x1xf32, #tpu.memory_space<vmem>>, vector<512x1xf32>
    %c0_13 = arith.constant 0 : index
    %c0_14 = arith.constant 0 : index
    %8 = vector.load %arg7[%c0_13, %c0_14] : memref<512x1xf32, #tpu.memory_space<vmem>>, vector<512x1xf32>
    %c0_15 = arith.constant 0 : index
    %c0_16 = arith.constant 0 : index
    %9 = vector.load %arg8[%c0_15, %c0_16] : memref<1x1xf32, #tpu.memory_space<vmem>>, vector<1x1xf32>
    %cst = arith.constant dense<0.000000e+00> : vector<8x512xf32>
    %10 = tpu.matmul %0, %2, %cst {dimension_numbers = #tpu.dot_dimension_numbers<[1], [0], [0], [1], [0, 0, 1, 1], [], []>} : vector<8x512xf32>, vector<512x512xf32>, vector<8x512xf32> -> vector<8x512xf32>
    %11 = vector.broadcast %3 : vector<1x512xf32> to vector<8x512xf32>
    %12 = arith.addf %10, %11 : vector<8x512xf32>
    %cst_17 = arith.constant dense<0.000000e+00> : vector<512xf32>
    %13 = vector.multi_reduction <add>, %12, %cst_17 [0] : vector<8x512xf32> to vector<512xf32>
    %14 = vector.shape_cast %13 : vector<512xf32> to vector<1x512xf32>
    %cst_18 = arith.constant 1.250000e-01 : f32
    %15 = vector.broadcast %cst_18 : f32 to vector<1x512xf32>
    %16 = arith.mulf %14, %15 : vector<1x512xf32>
    %17 = arith.mulf %12, %12 : vector<8x512xf32>
    %cst_19 = arith.constant dense<0.000000e+00> : vector<512xf32>
    %18 = vector.multi_reduction <add>, %17, %cst_19 [0] : vector<8x512xf32> to vector<512xf32>
    %19 = vector.shape_cast %18 : vector<512xf32> to vector<1x512xf32>
    %cst_20 = arith.constant 1.250000e-01 : f32
    %20 = vector.broadcast %cst_20 : f32 to vector<1x512xf32>
    %21 = arith.mulf %19, %20 : vector<1x512xf32>
    %22 = arith.mulf %16, %16 : vector<1x512xf32>
    %23 = arith.subf %21, %22 : vector<1x512xf32>
    %24 = vector.broadcast %16 : vector<1x512xf32> to vector<8x512xf32>
    %25 = arith.subf %12, %24 : vector<8x512xf32>
    %cst_21 = arith.constant 9.99999974E-6 : f32
    %26 = vector.broadcast %cst_21 : f32 to vector<1x512xf32>
    %27 = arith.addf %23, %26 : vector<1x512xf32>
    %28 = math.rsqrt %27 : vector<1x512xf32>
    %29 = vector.broadcast %28 : vector<1x512xf32> to vector<8x512xf32>
    %30 = arith.mulf %25, %29 : vector<8x512xf32>
    %31 = vector.broadcast %4 : vector<1x512xf32> to vector<8x512xf32>
    %32 = arith.mulf %30, %31 : vector<8x512xf32>
    %33 = vector.broadcast %5 : vector<1x512xf32> to vector<8x512xf32>
    %34 = arith.addf %32, %33 : vector<8x512xf32>
    %cst_22 = arith.constant 0.000000e+00 : f32
    %35 = vector.broadcast %cst_22 : f32 to vector<8x512xf32>
    %36 = arith.cmpf oge, %34, %35 : vector<8x512xf32>
    %37 = vector.broadcast %6 : vector<1x1xf32> to vector<8x512xf32>
    %38 = arith.mulf %37, %34 : vector<8x512xf32>
    %39 = arith.select %36, %34, %38 : vector<8x512xi1>, vector<8x512xf32>
    %cst_23 = arith.constant dense<0.000000e+00> : vector<8x1xf32>
    %40 = tpu.matmul %0, %7, %cst_23 {dimension_numbers = #tpu.dot_dimension_numbers<[1], [0], [0], [1], [0, 0, 1, 1], [], []>} : vector<8x512xf32>, vector<512x1xf32>, vector<8x1xf32> -> vector<8x1xf32>
    %cst_24 = arith.constant dense<0.000000e+00> : vector<8x1xf32>
    %41 = tpu.matmul %39, %8, %cst_24 {dimension_numbers = #tpu.dot_dimension_numbers<[1], [0], [0], [1], [0, 0, 1, 1], [], []>} : vector<8x512xf32>, vector<512x1xf32>, vector<8x1xf32> -> vector<8x1xf32>
    %42 = arith.addf %40, %41 : vector<8x1xf32>
    %43 = vector.broadcast %9 : vector<1x1xf32> to vector<8x1xf32>
    %44 = arith.addf %42, %43 : vector<8x1xf32>
    %45 = arith.negf %44 : vector<8x1xf32>
    %46 = math.exp %45 : vector<8x1xf32>
    %cst_25 = arith.constant 1.000000e+00 : f32
    %47 = vector.broadcast %cst_25 : f32 to vector<8x1xf32>
    %48 = arith.addf %47, %46 : vector<8x1xf32>
    %49 = arith.divf %47, %48 : vector<8x1xf32>
    %50 = vector.broadcast %49 : vector<8x1xf32> to vector<8x512xf32>
    %51 = arith.mulf %39, %50 : vector<8x512xf32>
    %52 = arith.subf %0, %51 : vector<8x512xf32>
    %cst_26 = arith.constant dense<0.000000e+00> : vector<8x512xf32>
    %53 = tpu.matmul %52, %2, %cst_26 {dimension_numbers = #tpu.dot_dimension_numbers<[1], [0], [0], [1], [0, 0, 1, 1], [], []>} : vector<8x512xf32>, vector<512x512xf32>, vector<8x512xf32> -> vector<8x512xf32>
    %54 = vector.broadcast %3 : vector<1x512xf32> to vector<8x512xf32>
    %55 = arith.addf %53, %54 : vector<8x512xf32>
    %cst_27 = arith.constant dense<0.000000e+00> : vector<512xf32>
    %56 = vector.multi_reduction <add>, %55, %cst_27 [0] : vector<8x512xf32> to vector<512xf32>
    %57 = vector.shape_cast %56 : vector<512xf32> to vector<1x512xf32>
    %cst_28 = arith.constant 1.250000e-01 : f32
    %58 = vector.broadcast %cst_28 : f32 to vector<1x512xf32>
    %59 = arith.mulf %57, %58 : vector<1x512xf32>
    %60 = arith.mulf %55, %55 : vector<8x512xf32>
    %cst_29 = arith.constant dense<0.000000e+00> : vector<512xf32>
    %61 = vector.multi_reduction <add>, %60, %cst_29 [0] : vector<8x512xf32> to vector<512xf32>
    %62 = vector.shape_cast %61 : vector<512xf32> to vector<1x512xf32>
    %cst_30 = arith.constant 1.250000e-01 : f32
    %63 = vector.broadcast %cst_30 : f32 to vector<1x512xf32>
    %64 = arith.mulf %62, %63 : vector<1x512xf32>
    %65 = arith.mulf %59, %59 : vector<1x512xf32>
    %66 = arith.subf %64, %65 : vector<1x512xf32>
    %67 = vector.broadcast %59 : vector<1x512xf32> to vector<8x512xf32>
    %68 = arith.subf %55, %67 : vector<8x512xf32>
    %cst_31 = arith.constant 9.99999974E-6 : f32
    %69 = vector.broadcast %cst_31 : f32 to vector<1x512xf32>
    %70 = arith.addf %66, %69 : vector<1x512xf32>
    %71 = math.rsqrt %70 : vector<1x512xf32>
    %72 = vector.broadcast %71 : vector<1x512xf32> to vector<8x512xf32>
    %73 = arith.mulf %68, %72 : vector<8x512xf32>
    %74 = vector.broadcast %4 : vector<1x512xf32> to vector<8x512xf32>
    %75 = arith.mulf %73, %74 : vector<8x512xf32>
    %76 = vector.broadcast %5 : vector<1x512xf32> to vector<8x512xf32>
    %77 = arith.addf %75, %76 : vector<8x512xf32>
    %cst_32 = arith.constant 0.000000e+00 : f32
    %78 = vector.broadcast %cst_32 : f32 to vector<8x512xf32>
    %79 = arith.cmpf oge, %77, %78 : vector<8x512xf32>
    %80 = vector.broadcast %6 : vector<1x1xf32> to vector<8x512xf32>
    %81 = arith.mulf %80, %77 : vector<8x512xf32>
    %82 = arith.select %79, %77, %81 : vector<8x512xi1>, vector<8x512xf32>
    %cst_33 = arith.constant dense<0.000000e+00> : vector<8x1xf32>
    %83 = tpu.matmul %52, %7, %cst_33 {dimension_numbers = #tpu.dot_dimension_numbers<[1], [0], [0], [1], [0, 0, 1, 1], [], []>} : vector<8x512xf32>, vector<512x1xf32>, vector<8x1xf32> -> vector<8x1xf32>
    %cst_34 = arith.constant dense<0.000000e+00> : vector<8x1xf32>
    %84 = tpu.matmul %82, %8, %cst_34 {dimension_numbers = #tpu.dot_dimension_numbers<[1], [0], [0], [1], [0, 0, 1, 1], [], []>} : vector<8x512xf32>, vector<512x1xf32>, vector<8x1xf32> -> vector<8x1xf32>
    %85 = arith.addf %83, %84 : vector<8x1xf32>
    %86 = vector.broadcast %9 : vector<1x1xf32> to vector<8x1xf32>
    %87 = arith.addf %85, %86 : vector<8x1xf32>
    %88 = arith.negf %87 : vector<8x1xf32>
    %89 = math.exp %88 : vector<8x1xf32>
    %cst_35 = arith.constant 1.000000e+00 : f32
    %90 = vector.broadcast %cst_35 : f32 to vector<8x1xf32>
    %91 = arith.addf %90, %89 : vector<8x1xf32>
    %92 = arith.divf %90, %91 : vector<8x1xf32>
    %93 = vector.broadcast %92 : vector<8x1xf32> to vector<8x512xf32>
    %94 = arith.mulf %82, %93 : vector<8x512xf32>
    %95 = arith.subf %52, %94 : vector<8x512xf32>
    %cst_36 = arith.constant dense<0.000000e+00> : vector<8x512xf32>
    %96 = tpu.matmul %95, %2, %cst_36 {dimension_numbers = #tpu.dot_dimension_numbers<[1], [0], [0], [1], [0, 0, 1, 1], [], []>} : vector<8x512xf32>, vector<512x512xf32>, vector<8x512xf32> -> vector<8x512xf32>
    %97 = vector.broadcast %3 : vector<1x512xf32> to vector<8x512xf32>
    %98 = arith.addf %96, %97 : vector<8x512xf32>
    %cst_37 = arith.constant dense<0.000000e+00> : vector<512xf32>
    %99 = vector.multi_reduction <add>, %98, %cst_37 [0] : vector<8x512xf32> to vector<512xf32>
    %100 = vector.shape_cast %99 : vector<512xf32> to vector<1x512xf32>
    %cst_38 = arith.constant 1.250000e-01 : f32
    %101 = vector.broadcast %cst_38 : f32 to vector<1x512xf32>
    %102 = arith.mulf %100, %101 : vector<1x512xf32>
    %103 = arith.mulf %98, %98 : vector<8x512xf32>
    %cst_39 = arith.constant dense<0.000000e+00> : vector<512xf32>
    %104 = vector.multi_reduction <add>, %103, %cst_39 [0] : vector<8x512xf32> to vector<512xf32>
    %105 = vector.shape_cast %104 : vector<512xf32> to vector<1x512xf32>
    %cst_40 = arith.constant 1.250000e-01 : f32
    %106 = vector.broadcast %cst_40 : f32 to vector<1x512xf32>
    %107 = arith.mulf %105, %106 : vector<1x512xf32>
    %108 = arith.mulf %102, %102 : vector<1x512xf32>
    %109 = arith.subf %107, %108 : vector<1x512xf32>
    %110 = vector.broadcast %102 : vector<1x512xf32> to vector<8x512xf32>
    %111 = arith.subf %98, %110 : vector<8x512xf32>
    %cst_41 = arith.constant 9.99999974E-6 : f32
    %112 = vector.broadcast %cst_41 : f32 to vector<1x512xf32>
    %113 = arith.addf %109, %112 : vector<1x512xf32>
    %114 = math.rsqrt %113 : vector<1x512xf32>
    %115 = vector.broadcast %114 : vector<1x512xf32> to vector<8x512xf32>
    %116 = arith.mulf %111, %115 : vector<8x512xf32>
    %117 = vector.broadcast %4 : vector<1x512xf32> to vector<8x512xf32>
    %118 = arith.mulf %116, %117 : vector<8x512xf32>
    %119 = vector.broadcast %5 : vector<1x512xf32> to vector<8x512xf32>
    %120 = arith.addf %118, %119 : vector<8x512xf32>
    %cst_42 = arith.constant 0.000000e+00 : f32
    %121 = vector.broadcast %cst_42 : f32 to vector<8x512xf32>
    %122 = arith.cmpf oge, %120, %121 : vector<8x512xf32>
    %123 = vector.broadcast %6 : vector<1x1xf32> to vector<8x512xf32>
    %124 = arith.mulf %123, %120 : vector<8x512xf32>
    %125 = arith.select %122, %120, %124 : vector<8x512xi1>, vector<8x512xf32>
    %cst_43 = arith.constant dense<0.000000e+00> : vector<8x1xf32>
    %126 = tpu.matmul %95, %7, %cst_43 {dimension_numbers = #tpu.dot_dimension_numbers<[1], [0], [0], [1], [0, 0, 1, 1], [], []>} : vector<8x512xf32>, vector<512x1xf32>, vector<8x1xf32> -> vector<8x1xf32>
    %cst_44 = arith.constant dense<0.000000e+00> : vector<8x1xf32>
    %127 = tpu.matmul %125, %8, %cst_44 {dimension_numbers = #tpu.dot_dimension_numbers<[1], [0], [0], [1], [0, 0, 1, 1], [], []>} : vector<8x512xf32>, vector<512x1xf32>, vector<8x1xf32> -> vector<8x1xf32>
    %128 = arith.addf %126, %127 : vector<8x1xf32>
    %129 = vector.broadcast %9 : vector<1x1xf32> to vector<8x1xf32>
    %130 = arith.addf %128, %129 : vector<8x1xf32>
    %131 = arith.negf %130 : vector<8x1xf32>
    %132 = math.exp %131 : vector<8x1xf32>
    %cst_45 = arith.constant 1.000000e+00 : f32
    %133 = vector.broadcast %cst_45 : f32 to vector<8x1xf32>
    %134 = arith.addf %133, %132 : vector<8x1xf32>
    %135 = arith.divf %133, %134 : vector<8x1xf32>
    %136 = vector.broadcast %135 : vector<8x1xf32> to vector<8x512xf32>
    %137 = arith.mulf %125, %136 : vector<8x512xf32>
    %138 = arith.subf %95, %137 : vector<8x512xf32>
    %c0_46 = arith.constant 0 : index
    %c0_47 = arith.constant 0 : index
    %139 = vector.load %arg9[%c0_46, %c0_47] : memref<8x512xf32, #tpu.memory_space<vmem>>, vector<8x512xf32>
    tpu.vector_store %arg9[%c0_46, %c0_47], %138 {strides = array<i32>} : memref<8x512xf32, #tpu.memory_space<vmem>>, vector<8x512xf32>,
    return
  }
}

</mosaic_0001>

<llo_original>
// kernel: cdnet_forward.1
$region0: #{cdnet_forward.1}
  #allocation0 [shape = 'u32[]', space=smem, size = 0x4, offset = 0x4, fixed_abs, tag = 'smem constant byte address 0x4 - core index']
  #allocation1 [shape = 'u32[144,128]{1,0:T(1,128)}', space=vmem, size = 0x12000, scoped, tag = 'internal scratch']
  #allocation2 [shape = 'f32[1,1]{1,0:T(1,128)S(1)}', space=vmem, size = 0x200, scoped, tag = 'scoped memory for cdnet_forward.1']
  #allocation3 [shape = 'f32[1,1]{1,0:T(1,128)S(1)}', space=vmem, size = 0x200, scoped, tag = 'scoped memory for cdnet_forward.1']
  %s0 = inlined_call_operand.vmem [shape: f32[8,512], index: 0, kind: input, shape index: {}]
  %s1 = inlined_call_operand.vmem [shape: bf16[512,512], index: 1, kind: input, shape index: {}]
  %s2 = inlined_call_operand.vmem [shape: f32[1,512], index: 2, kind: input, shape index: {}]
  %s3 = inlined_call_operand.vmem [shape: f32[1,512], index: 3, kind: input, shape index: {}]
  %s4 = inlined_call_operand.vmem [shape: f32[1,512], index: 4, kind: input, shape index: {}]
  %s5 = inlined_call_operand.<no memory space> [shape: f32[1,1], index: 5, kind: input, shape index: {}]
  %s6 = inlined_call_operand.vmem [shape: f32[512,1], index: 6, kind: input, shape index: {}]
  %s7 = inlined_call_operand.vmem [shape: f32[512,1], index: 7, kind: input, shape index: {}]
  %s8 = inlined_call_operand.<no memory space> [shape: f32[1,1], index: 8, kind: input, shape index: {}]
  %s9 = inlined_call_operand.hbm [shape: f32[8,512], index: 9, kind: output, shape index: {}]
  %s10 = sld [smem:[#allocation0]]
  $region46: #{cdnet_forward.1} parent=0
    _
  %s12 = ssub.s32 1, %s10
  %s13 = scalar_select 0, %s12, %s10
  %v14 = vstv %s5
  %15 = vst [vmem:[#allocation2] sm:$0x1] %v14
  %v16 = vstv %s8
  %17 = vst [vmem:[#allocation3] sm:$0x1] %v16
  $region1: #{cdnet_forward.1} parent=0
    #allocation4 [shape = 'u8[16384]{0}', space=vmem, size = 0x4000, scoped, tag = 'output window, operand 0, single buffered']
    #allocation5 [shape = 's32[1]{0}', space=sflag, size = 0x4, scoped, tag = 'scoped memory for cdnet_forward.1']
    %18 = vsyncpa [#allocation5], 0
    // Predicated region
    $region2: #{cdnet_forward.1} parent=1 // pred_check
      _
    $region3: #{cdnet_forward.1} parent=1 // pred_check_branch
      %20 = sbr.rel (0) target = $region5
    $region4: #{cdnet_forward.1} parent=1 // pred_region
      _
    $region5: #{cdnet_forward.1} parent=1 // pred_fallthru
      _
    // Predicated region
    $region6: #{cdnet_forward.1} parent=1 // pred_check
      _
    $region7: #{cdnet_forward.1} parent=1 // pred_check_branch
      %22 = sbr.rel (0) target = $region9
    $region8: #{cdnet_forward.1} parent=1 // pred_region
      _
    $region9: #{cdnet_forward.1} parent=1 // pred_fallthru
      _
    // Predicated region
    $region10: #{cdnet_forward.1} parent=1 // pred_check
      _
    $region11: #{cdnet_forward.1} parent=1 // pred_check_branch
      %24 = sbr.rel (0) target = $region13
    $region12: #{cdnet_forward.1} parent=1 // pred_region
      _
    $region13: #{cdnet_forward.1} parent=1 // pred_fallthru
      _
    // Predicated region
    $region14: #{cdnet_forward.1} parent=1 // pred_check
      _
    $region15: #{cdnet_forward.1} parent=1 // pred_check_branch
      %26 = sbr.rel (0) target = $region17
    $region16: #{cdnet_forward.1} parent=1 // pred_region
      _
    $region17: #{cdnet_forward.1} parent=1 // pred_fallthru
      _
    // Predicated region
    $region18: #{cdnet_forward.1} parent=1 // pred_check
      _
    $region19: #{cdnet_forward.1} parent=1 // pred_check_branch
      %28 = sbr.rel (0) target = $region21
    $region20: #{cdnet_forward.1} parent=1 // pred_region
      _
    $region21: #{cdnet_forward.1} parent=1 // pred_fallthru
      _
    // Predicated region
    $region22: #{cdnet_forward.1} parent=1 // pred_check
      _
    $region23: #{cdnet_forward.1} parent=1 // pred_check_branch
      %30 = sbr.rel (0) target = $region25
    $region24: #{cdnet_forward.1} parent=1 // pred_region
      _
    $region25: #{cdnet_forward.1} parent=1 // pred_fallthru
      _
    // Predicated region
    $region26: #{cdnet_forward.1} parent=1 // pred_check
      _
    $region27: #{cdnet_forward.1} parent=1 // pred_check_branch
      %32 = sbr.rel (0) target = $region29
    $region28: #{cdnet_forward.1} parent=1 // pred_region
      _
    $region29: #{cdnet_forward.1} parent=1 // pred_fallthru
      _
    // Predicated region
    $region30: #{cdnet_forward.1} parent=1 // pred_check
      _
    $region31: #{cdnet_forward.1} parent=1 // pred_check_branch
      %34 = sbr.rel (0) target = $region33
    $region32: #{cdnet_forward.1} parent=1 // pred_region
      _
    $region33: #{cdnet_forward.1} parent=1 // pred_fallthru
      _
    // Predicated region
    $region34: #{cdnet_forward.1} parent=1 // pred_check
      _
    $region35: #{cdnet_forward.1} parent=1 // pred_check_branch
      %36 = sbr.rel (0) target = $region37
    $region36: #{cdnet_forward.1} parent=1 // pred_region
      _
    $region37: #{cdnet_forward.1} parent=1 // pred_fallthru
      _
    %v37 = vld [vmem:[%s0] sm:$0xff]
    %v38 = vld [vmem:[%s0 + $0x8] sm:$0xff]
    %v39 = vld [vmem:[%s0 + $0x10] sm:$0xff]
    %v40 = vld [vmem:[%s0 + $0x18] sm:$0xff]
    %v41 = vld [vmem:[%s1] sm:$0xff]
    %v42 = vld [vmem:[%s1 + $0x8] sm:$0xff]
    %v43 = vld [vmem:[%s1 + $0x10] sm:$0xff]
    %v44 = vld [vmem:[%s1 + $0x18] sm:$0xff]
    %v45 = vld [vmem:[%s1 + $0x20] sm:$0xff]
    %v46 = vld [vmem:[%s1 + $0x28] sm:$0xff]
    %v47 = vld [vmem:[%s1 + $0x30] sm:$0xff]
    %v48 = vld [vmem:[%s1 + $0x38] sm:$0xff]
    %v49 = vld [vmem:[%s1 + $0x40] sm:$0xff]
    %v50 = vld [vmem:[%s1 + $0x48] sm:$0xff]
    %v51 = vld [vmem:[%s1 + $0x50] sm:$0xff]
    %v52 = vld [vmem:[%s1 + $0x58] sm:$0xff]
    %v53 = vld [vmem:[%s1 + $0x60] sm:$0xff]
    %v54 = vld [vmem:[%s1 + $0x68] sm:$0xff]
    %v55 = vld [vmem:[%s1 + $0x70] sm:$0xff]
    %v56 = vld [vmem:[%s1 + $0x78] sm:$0xff]
    %v57 = vld [vmem:[%s1 + $0x80] sm:$0xff]
    %v58 = vld [vmem:[%s1 + $0x88] sm:$0xff]
    %v59 = vld [vmem:[%s1 + $0x90] sm:$0xff]
    %v60 = vld [vmem:[%s1 + $0x98] sm:$0xff]
    %v61 = vld [vmem:[%s1 + $0xa0] sm:$0xff]
    %v62 = vld [vmem:[%s1 + $0xa8] sm:$0xff]
    %v63 = vld [vmem:[%s1 + $0xb0] sm:$0xff]
    %v64 = vld [vmem:[%s1 + $0xb8] sm:$0xff]
    %v65 = vld [vmem:[%s1 + $0xc0] sm:$0xff]
    %v66 = vld [vmem:[%s1 + $0xc8] sm:$0xff]
    %v67 = vld [vmem:[%s1 + $0xd0] sm:$0xff]
    %v68 = vld [vmem:[%s1 + $0xd8] sm:$0xff]
    %v69 = vld [vmem:[%s1 + $0xe0] sm:$0xff]
    %v70 = vld [vmem:[%s1 + $0xe8] sm:$0xff]
    %v71 = vld [vmem:[%s1 + $0xf0] sm:$0xff]
    %v72 = vld [vmem:[%s1 + $0xf8] sm:$0xff]
    %v73 = vld [vmem:[%s1 + $0x100] sm:$0xff]
    %v74 = vld [vmem:[%s1 + $0x108] sm:$0xff]
    %v75 = vld [vmem:[%s1 + $0x110] sm:$0xff]
    %v76 = vld [vmem:[%s1 + $0x118] sm:$0xff]
    %v77 = vld [vmem:[%s1 + $0x120] sm:$0xff]
    %v78 = vld [vmem:[%s1 + $0x128] sm:$0xff]
    %v79 = vld [vmem:[%s1 + $0x130] sm:$0xff]
    %v80 = vld [vmem:[%s1 + $0x138] sm:$0xff]
    %v81 = vld [vmem:[%s1 + $0x140] sm:$0xff]
    %v82 = vld [vmem:[%s1 + $0x148] sm:$0xff]
    %v83 = vld [vmem:[%s1 + $0x150] sm:$0xff]
    %v84 = vld [vmem:[%s1 + $0x158] sm:$0xff]
    %v85 = vld [vmem:[%s1 + $0x160] sm:$0xff]
    %v86 = vld [vmem:[%s1 + $0x168] sm:$0xff]
    %v87 = vld [vmem:[%s1 + $0x170] sm:$0xff]
    %v88 = vld [vmem:[%s1 + $0x178] sm:$0xff]
    %v89 = vld [vmem:[%s1 + $0x180] sm:$0xff]
    %v90 = vld [vmem:[%s1 + $0x188] sm:$0xff]
    %v91 = vld [vmem:[%s1 + $0x190] sm:$0xff]
    %v92 = vld [vmem:[%s1 + $0x198] sm:$0xff]
    %v93 = vld [vmem:[%s1 + $0x1a0] sm:$0xff]
    %v94 = vld [vmem:[%s1 + $0x1a8] sm:$0xff]
    %v95 = vld [vmem:[%s1 + $0x1b0] sm:$0xff]
    %v96 = vld [vmem:[%s1 + $0x1b8] sm:$0xff]
    %v97 = vld [vmem:[%s1 + $0x1c0] sm:$0xff]
    %v98 = vld [vmem:[%s1 + $0x1c8] sm:$0xff]
    %v99 = vld [vmem:[%s1 + $0x1d0] sm:$0xff]
    %v100 = vld [vmem:[%s1 + $0x1d8] sm:$0xff]
    %v101 = vld [vmem:[%s1 + $0x1e0] sm:$0xff]
    %v102 = vld [vmem:[%s1 + $0x1e8] sm:$0xff]
    %v103 = vld [vmem:[%s1 + $0x1f0] sm:$0xff]
    %v104 = vld [vmem:[%s1 + $0x1f8] sm:$0xff]
    %v105 = vld [vmem:[%s1 + $0x200] sm:$0xff]
    %v106 = vld [vmem:[%s1 + $0x208] sm:$0xff]
    %v107 = vld [vmem:[%s1 + $0x210] sm:$0xff]
    %v108 = vld [vmem:[%s1 + $0x218] sm:$0xff]
    %v109 = vld [vmem:[%s1 + $0x220] sm:$0xff]
    %v110 = vld [vmem:[%s1 + $0x228] sm:$0xff]
    %v111 = vld [vmem:[%s1 + $0x230] sm:$0xff]
    %v112 = vld [vmem:[%s1 + $0x238] sm:$0xff]
    %v113 = vld [vmem:[%s1 + $0x240] sm:$0xff]
    %v114 = vld [vmem:[%s1 + $0x248] sm:$0xff]
    %v115 = vld [vmem:[%s1 + $0x250] sm:$0xff]
    %v116 = vld [vmem:[%s1 + $0x258] sm:$0xff]
    %v117 = vld [vmem:[%s1 + $0x260] sm:$0xff]
    %v118 = vld [vmem:[%s1 + $0x268] sm:$0xff]
    %v119 = vld [vmem:[%s1 + $0x270] sm:$0xff]
    %v120 = vld [vmem:[%s1 + $0x278] sm:$0xff]
    %v121 = vld [vmem:[%s1 + $0x280] sm:$0xff]
    %v122 = vld [vmem:[%s1 + $0x288] sm:$0xff]
    %v123 = vld [vmem:[%s1 + $0x290] sm:$0xff]
    %v124 = vld [vmem:[%s1 + $0x298] sm:$0xff]
    %v125 = vld [vmem:[%s1 + $0x2a0] sm:$0xff]
    %v126 = vld [vmem:[%s1 + $0x2a8] sm:$0xff]
    %v127 = vld [vmem:[%s1 + $0x2b0] sm:$0xff]
    %v128 = vld [vmem:[%s1 + $0x2b8] sm:$0xff]
    %v129 = vld [vmem:[%s1 + $0x2c0] sm:$0xff]
    %v130 = vld [vmem:[%s1 + $0x2c8] sm:$0xff]
    %v131 = vld [vmem:[%s1 + $0x2d0] sm:$0xff]
    %v132 = vld [vmem:[%s1 + $0x2d8] sm:$0xff]
    %v133 = vld [vmem:[%s1 + $0x2e0] sm:$0xff]
    %v134 = vld [vmem:[%s1 + $0x2e8] sm:$0xff]
    %v135 = vld [vmem:[%s1 + $0x2f0] sm:$0xff]
    %v136 = vld [vmem:[%s1 + $0x2f8] sm:$0xff]
    %v137 = vld [vmem:[%s1 + $0x300] sm:$0xff]
    %v138 = vld [vmem:[%s1 + $0x308] sm:$0xff]
    %v139 = vld [vmem:[%s1 + $0x310] sm:$0xff]
    %v140 = vld [vmem:[%s1 + $0x318] sm:$0xff]
    %v141 = vld [vmem:[%s1 + $0x320] sm:$0xff]
    %v142 = vld [vmem:[%s1 + $0x328] sm:$0xff]
    %v143 = vld [vmem:[%s1 + $0x330] sm:$0xff]
    %v144 = vld [vmem:[%s1 + $0x338] sm:$0xff]
    %v145 = vld [vmem:[%s1 + $0x340] sm:$0xff]
    %v146 = vld [vmem:[%s1 + $0x348] sm:$0xff]
    %v147 = vld [vmem:[%s1 + $0x350] sm:$0xff]
    %v148 = vld [vmem:[%s1 + $0x358] sm:$0xff]
    %v149 = vld [vmem:[%s1 + $0x360] sm:$0xff]
    %v150 = vld [vmem:[%s1 + $0x368] sm:$0xff]
    %v151 = vld [vmem:[%s1 + $0x370] sm:$0xff]
    %v152 = vld [vmem:[%s1 + $0x378] sm:$0xff]
    %v153 = vld [vmem:[%s1 + $0x380] sm:$0xff]
    %v154 = vld [vmem:[%s1 + $0x388] sm:$0xff]
    %v155 = vld [vmem:[%s1 + $0x390] sm:$0xff]
    %v156 = vld [vmem:[%s1 + $0x398] sm:$0xff]
    %v157 = vld [vmem:[%s1 + $0x3a0] sm:$0xff]
    %v158 = vld [vmem:[%s1 + $0x3a8] sm:$0xff]
    %v159 = vld [vmem:[%s1 + $0x3b0] sm:$0xff]
    %v160 = vld [vmem:[%s1 + $0x3b8] sm:$0xff]
    %v161 = vld [vmem:[%s1 + $0x3c0] sm:$0xff]
    %v162 = vld [vmem:[%s1 + $0x3c8] sm:$0xff]
    %v163 = vld [vmem:[%s1 + $0x3d0] sm:$0xff]
    %v164 = vld [vmem:[%s1 + $0x3d8] sm:$0xff]
    %v165 = vld [vmem:[%s1 + $0x3e0] sm:$0xff]
    %v166 = vld [vmem:[%s1 + $0x3e8] sm:$0xff]
    %v167 = vld [vmem:[%s1 + $0x3f0] sm:$0xff]
    %v168 = vld [vmem:[%s1 + $0x3f8] sm:$0xff]
    %v169 = vunpack.c.l.bf16 %v41
    %v170 = vunpack.c.h.bf16 %v41
    %v171 = vunpack.c.l.bf16 %v42
    %v172 = vunpack.c.h.bf16 %v42
    %v173 = vunpack.c.l.bf16 %v43
    %v174 = vunpack.c.h.bf16 %v43
    %v175 = vunpack.c.l.bf16 %v44
    %v176 = vunpack.c.h.bf16 %v44
    %v177 = vunpack.c.l.bf16 %v45
    %v178 = vunpack.c.h.bf16 %v45
    %v179 = vunpack.c.l.bf16 %v46
    %v180 = vunpack.c.h.bf16 %v46
    %v181 = vunpack.c.l.bf16 %v47
    %v182 = vunpack.c.h.bf16 %v47
    %v183 = vunpack.c.l.bf16 %v48
    %v184 = vunpack.c.h.bf16 %v48
    %v185 = vunpack.c.l.bf16 %v49
    %v186 = vunpack.c.h.bf16 %v49
    %v187 = vunpack.c.l.bf16 %v50
    %v188 = vunpack.c.h.bf16 %v50
    %v189 = vunpack.c.l.bf16 %v51
    %v190 = vunpack.c.h.bf16 %v51
    %v191 = vunpack.c.l.bf16 %v52
    %v192 = vunpack.c.h.bf16 %v52
    %v193 = vunpack.c.l.bf16 %v53
    %v194 = vunpack.c.h.bf16 %v53
    %v195 = vunpack.c.l.bf16 %v54
    %v196 = vunpack.c.h.bf16 %v54
    %v197 = vunpack.c.l.bf16 %v55
    %v198 = vunpack.c.h.bf16 %v55
    %v199 = vunpack.c.l.bf16 %v56
    %v200 = vunpack.c.h.bf16 %v56
    %v201 = vunpack.c.l.bf16 %v57
    %v202 = vunpack.c.h.bf16 %v57
    %v203 = vunpack.c.l.bf16 %v58
    %v204 = vunpack.c.h.bf16 %v58
    %v205 = vunpack.c.l.bf16 %v59
    %v206 = vunpack.c.h.bf16 %v59
    %v207 = vunpack.c.l.bf16 %v60
    %v208 = vunpack.c.h.bf16 %v60
    %v209 = vunpack.c.l.bf16 %v61
    %v210 = vunpack.c.h.bf16 %v61
    %v211 = vunpack.c.l.bf16 %v62
    %v212 = vunpack.c.h.bf16 %v62
    %v213 = vunpack.c.l.bf16 %v63
    %v214 = vunpack.c.h.bf16 %v63
    %v215 = vunpack.c.l.bf16 %v64
    %v216 = vunpack.c.h.bf16 %v64
    %v217 = vunpack.c.l.bf16 %v65
    %v218 = vunpack.c.h.bf16 %v65
    %v219 = vunpack.c.l.bf16 %v66
    %v220 = vunpack.c.h.bf16 %v66
    %v221 = vunpack.c.l.bf16 %v67
    %v222 = vunpack.c.h.bf16 %v67
    %v223 = vunpack.c.l.bf16 %v68
    %v224 = vunpack.c.h.bf16 %v68
    %v225 = vunpack.c.l.bf16 %v69
    %v226 = vunpack.c.h.bf16 %v69
    %v227 = vunpack.c.l.bf16 %v70
    %v228 = vunpack.c.h.bf16 %v70
    %v229 = vunpack.c.l.bf16 %v71
    %v230 = vunpack.c.h.bf16 %v71
    %v231 = vunpack.c.l.bf16 %v72
    %v232 = vunpack.c.h.bf16 %v72
    %v233 = vunpack.c.l.bf16 %v73
    %v234 = vunpack.c.h.bf16 %v73
    %v235 = vunpack.c.l.bf16 %v74
    %v236 = vunpack.c.h.bf16 %v74
    %v237 = vunpack.c.l.bf16 %v75
    %v238 = vunpack.c.h.bf16 %v75
    %v239 = vunpack.c.l.bf16 %v76
    %v240 = vunpack.c.h.bf16 %v76
    %v241 = vunpack.c.l.bf16 %v77
    %v242 = vunpack.c.h.bf16 %v77
    %v243 = vunpack.c.l.bf16 %v78
    %v244 = vunpack.c.h.bf16 %v78
    %v245 = vunpack.c.l.bf16 %v79
    %v246 = vunpack.c.h.bf16 %v79
    %v247 = vunpack.c.l.bf16 %v80
    %v248 = vunpack.c.h.bf16 %v80
    %v249 = vunpack.c.l.bf16 %v81
    %v250 = vunpack.c.h.bf16 %v81
    %v251 = vunpack.c.l.bf16 %v82
    %v252 = vunpack.c.h.bf16 %v82
    %v253 = vunpack.c.l.bf16 %v83
    %v254 = vunpack.c.h.bf16 %v83
    %v255 = vunpack.c.l.bf16 %v84
    %v256 = vunpack.c.h.bf16 %v84
    %v257 = vunpack.c.l.bf16 %v85
    %v258 = vunpack.c.h.bf16 %v85
    %v259 = vunpack.c.l.bf16 %v86
    %v260 = vunpack.c.h.bf16 %v86
    %v261 = vunpack.c.l.bf16 %v87
    %v262 = vunpack.c.h.bf16 %v87
    %v263 = vunpack.c.l.bf16 %v88
    %v264 = vunpack.c.h.bf16 %v88
    %v265 = vunpack.c.l.bf16 %v89
    %v266 = vunpack.c.h.bf16 %v89
    %v267 = vunpack.c.l.bf16 %v90
    %v268 = vunpack.c.h.bf16 %v90
    %v269 = vunpack.c.l.bf16 %v91
    %v270 = vunpack.c.h.bf16 %v91
    %v271 = vunpack.c.l.bf16 %v92
    %v272 = vunpack.c.h.bf16 %v92
    %v273 = vunpack.c.l.bf16 %v93
    %v274 = vunpack.c.h.bf16 %v93
    %v275 = vunpack.c.l.bf16 %v94
    %v276 = vunpack.c.h.bf16 %v94
    %v277 = vunpack.c.l.bf16 %v95
    %v278 = vunpack.c.h.bf16 %v95
    %v279 = vunpack.c.l.bf16 %v96
    %v280 = vunpack.c.h.bf16 %v96
    %v281 = vunpack.c.l.bf16 %v97
    %v282 = vunpack.c.h.bf16 %v97
    %v283 = vunpack.c.l.bf16 %v98
    %v284 = vunpack.c.h.bf16 %v98
    %v285 = vunpack.c.l.bf16 %v99
    %v286 = vunpack.c.h.bf16 %v99
    %v287 = vunpack.c.l.bf16 %v100
    %v288 = vunpack.c.h.bf16 %v100
    %v289 = vunpack.c.l.bf16 %v101
    %v290 = vunpack.c.h.bf16 %v101
    %v291 = vunpack.c.l.bf16 %v102
    %v292 = vunpack.c.h.bf16 %v102
    %v293 = vunpack.c.l.bf16 %v103
    %v294 = vunpack.c.h.bf16 %v103
    %v295 = vunpack.c.l.bf16 %v104
    %v296 = vunpack.c.h.bf16 %v104
    %v297 = vunpack.c.l.bf16 %v105
    %v298 = vunpack.c.h.bf16 %v105
    %v299 = vunpack.c.l.bf16 %v106
    %v300 = vunpack.c.h.bf16 %v106
    %v301 = vunpack.c.l.bf16 %v107
    %v302 = vunpack.c.h.bf16 %v107
    %v303 = vunpack.c.l.bf16 %v108
    %v304 = vunpack.c.h.bf16 %v108
    %v305 = vunpack.c.l.bf16 %v109
    %v306 = vunpack.c.h.bf16 %v109
    %v307 = vunpack.c.l.bf16 %v110
    %v308 = vunpack.c.h.bf16 %v110
    %v309 = vunpack.c.l.bf16 %v111
    %v310 = vunpack.c.h.bf16 %v111
    %v311 = vunpack.c.l.bf16 %v112
    %v312 = vunpack.c.h.bf16 %v112
    %v313 = vunpack.c.l.bf16 %v113
    %v314 = vunpack.c.h.bf16 %v113
    %v315 = vunpack.c.l.bf16 %v114
    %v316 = vunpack.c.h.bf16 %v114
    %v317 = vunpack.c.l.bf16 %v115
    %v318 = vunpack.c.h.bf16 %v115
    %v319 = vunpack.c.l.bf16 %v116
    %v320 = vunpack.c.h.bf16 %v116
    %v321 = vunpack.c.l.bf16 %v117
    %v322 = vunpack.c.h.bf16 %v117
    %v323 = vunpack.c.l.bf16 %v118
    %v324 = vunpack.c.h.bf16 %v118
    %v325 = vunpack.c.l.bf16 %v119
    %v326 = vunpack.c.h.bf16 %v119
    %v327 = vunpack.c.l.bf16 %v120
    %v328 = vunpack.c.h.bf16 %v120
    %v329 = vunpack.c.l.bf16 %v121
    %v330 = vunpack.c.h.bf16 %v121
    %v331 = vunpack.c.l.bf16 %v122
    %v332 = vunpack.c.h.bf16 %v122
    %v333 = vunpack.c.l.bf16 %v123
    %v334 = vunpack.c.h.bf16 %v123
    %v335 = vunpack.c.l.bf16 %v124
    %v336 = vunpack.c.h.bf16 %v124
    %v337 = vunpack.c.l.bf16 %v125
    %v338 = vunpack.c.h.bf16 %v125
    %v339 = vunpack.c.l.bf16 %v126
    %v340 = vunpack.c.h.bf16 %v126
    %v341 = vunpack.c.l.bf16 %v127
    %v342 = vunpack.c.h.bf16 %v127
    %v343 = vunpack.c.l.bf16 %v128
    %v344 = vunpack.c.h.bf16 %v128
    %v345 = vunpack.c.l.bf16 %v129
    %v346 = vunpack.c.h.bf16 %v129
    %v347 = vunpack.c.l.bf16 %v130
    %v348 = vunpack.c.h.bf16 %v130
    %v349 = vunpack.c.l.bf16 %v131
    %v350 = vunpack.c.h.bf16 %v131
    %v351 = vunpack.c.l.bf16 %v132
    %v352 = vunpack.c.h.bf16 %v132
    %v353 = vunpack.c.l.bf16 %v133
    %v354 = vunpack.c.h.bf16 %v133
    %v355 = vunpack.c.l.bf16 %v134
    %v356 = vunpack.c.h.bf16 %v134
    %v357 = vunpack.c.l.bf16 %v135
    %v358 = vunpack.c.h.bf16 %v135
    %v359 = vunpack.c.l.bf16 %v136
    %v360 = vunpack.c.h.bf16 %v136
    %v361 = vunpack.c.l.bf16 %v137
    %v362 = vunpack.c.h.bf16 %v137
    %v363 = vunpack.c.l.bf16 %v138
    %v364 = vunpack.c.h.bf16 %v138
    %v365 = vunpack.c.l.bf16 %v139
    %v366 = vunpack.c.h.bf16 %v139
    %v367 = vunpack.c.l.bf16 %v140
    %v368 = vunpack.c.h.bf16 %v140
    %v369 = vunpack.c.l.bf16 %v141
    %v370 = vunpack.c.h.bf16 %v141
    %v371 = vunpack.c.l.bf16 %v142
    %v372 = vunpack.c.h.bf16 %v142
    %v373 = vunpack.c.l.bf16 %v143
    %v374 = vunpack.c.h.bf16 %v143
    %v375 = vunpack.c.l.bf16 %v144
    %v376 = vunpack.c.h.bf16 %v144
    %v377 = vunpack.c.l.bf16 %v145
    %v378 = vunpack.c.h.bf16 %v145
    %v379 = vunpack.c.l.bf16 %v146
    %v380 = vunpack.c.h.bf16 %v146
    %v381 = vunpack.c.l.bf16 %v147
    %v382 = vunpack.c.h.bf16 %v147
    %v383 = vunpack.c.l.bf16 %v148
    %v384 = vunpack.c.h.bf16 %v148
    %v385 = vunpack.c.l.bf16 %v149
    %v386 = vunpack.c.h.bf16 %v149
    %v387 = vunpack.c.l.bf16 %v150
    %v388 = vunpack.c.h.bf16 %v150
    %v389 = vunpack.c.l.bf16 %v151
    %v390 = vunpack.c.h.bf16 %v151
    %v391 = vunpack.c.l.bf16 %v152
    %v392 = vunpack.c.h.bf16 %v152
    %v393 = vunpack.c.l.bf16 %v153
    %v394 = vunpack.c.h.bf16 %v153
    %v395 = vunpack.c.l.bf16 %v154
    %v396 = vunpack.c.h.bf16 %v154
    %v397 = vunpack.c.l.bf16 %v155
    %v398 = vunpack.c.h.bf16 %v155
    %v399 = vunpack.c.l.bf16 %v156
    %v400 = vunpack.c.h.bf16 %v156
    %v401 = vunpack.c.l.bf16 %v157
    %v402 = vunpack.c.h.bf16 %v157
    %v403 = vunpack.c.l.bf16 %v158
    %v404 = vunpack.c.h.bf16 %v158
    %v405 = vunpack.c.l.bf16 %v159
    %v406 = vunpack.c.h.bf16 %v159
    %v407 = vunpack.c.l.bf16 %v160
    %v408 = vunpack.c.h.bf16 %v160
    %v409 = vunpack.c.l.bf16 %v161
    %v410 = vunpack.c.h.bf16 %v161
    %v411 = vunpack.c.l.bf16 %v162
    %v412 = vunpack.c.h.bf16 %v162
    %v413 = vunpack.c.l.bf16 %v163
    %v414 = vunpack.c.h.bf16 %v163
    %v415 = vunpack.c.l.bf16 %v164
    %v416 = vunpack.c.h.bf16 %v164
    %v417 = vunpack.c.l.bf16 %v165
    %v418 = vunpack.c.h.bf16 %v165
    %v419 = vunpack.c.l.bf16 %v166
    %v420 = vunpack.c.h.bf16 %v166
    %v421 = vunpack.c.l.bf16 %v167
    %v422 = vunpack.c.h.bf16 %v167
    %v423 = vunpack.c.l.bf16 %v168
    %v424 = vunpack.c.h.bf16 %v168
    %v425 = vld [vmem:[%s2] sm:$0xf]
    %v426 = vld [vmem:[%s3] sm:$0xf]
    %v427 = vld [vmem:[%s4] sm:$0xf]
    %v428 = vld [vmem:[#allocation2] sm:$0x1]
    %v429 = vld [vmem:[%s6] sm:$0xff]
    %v430 = vld [vmem:[%s6 + $0x8] sm:$0xff]
    %v431 = vld [vmem:[%s6 + $0x10] sm:$0xff]
    %v432 = vld [vmem:[%s6 + $0x18] sm:$0xff]
    %v433 = vld [vmem:[%s6 + $0x20] sm:$0xff]
    %v434 = vld [vmem:[%s6 + $0x28] sm:$0xff]
    %v435 = vld [vmem:[%s6 + $0x30] sm:$0xff]
    %v436 = vld [vmem:[%s6 + $0x38] sm:$0xff]
    %v437 = vld [vmem:[%s6 + $0x40] sm:$0xff]
    %v438 = vld [vmem:[%s6 + $0x48] sm:$0xff]
    %v439 = vld [vmem:[%s6 + $0x50] sm:$0xff]
    %v440 = vld [vmem:[%s6 + $0x58] sm:$0xff]
    %v441 = vld [vmem:[%s6 + $0x60] sm:$0xff]
    %v442 = vld [vmem:[%s6 + $0x68] sm:$0xff]
    %v443 = vld [vmem:[%s6 + $0x70] sm:$0xff]
    %v444 = vld [vmem:[%s6 + $0x78] sm:$0xff]
    %v445 = vld [vmem:[%s6 + $0x80] sm:$0xff]
    %v446 = vld [vmem:[%s6 + $0x88] sm:$0xff]
    %v447 = vld [vmem:[%s6 + $0x90] sm:$0xff]
    %v448 = vld [vmem:[%s6 + $0x98] sm:$0xff]
    %v449 = vld [vmem:[%s6 + $0xa0] sm:$0xff]
    %v450 = vld [vmem:[%s6 + $0xa8] sm:$0xff]
    %v451 = vld [vmem:[%s6 + $0xb0] sm:$0xff]
    %v452 = vld [vmem:[%s6 + $0xb8] sm:$0xff]
    %v453 = vld [vmem:[%s6 + $0xc0] sm:$0xff]
    %v454 = vld [vmem:[%s6 + $0xc8] sm:$0xff]
    %v455 = vld [vmem:[%s6 + $0xd0] sm:$0xff]
    %v456 = vld [vmem:[%s6 + $0xd8] sm:$0xff]
    %v457 = vld [vmem:[%s6 + $0xe0] sm:$0xff]
    %v458 = vld [vmem:[%s6 + $0xe8] sm:$0xff]
    %v459 = vld [vmem:[%s6 + $0xf0] sm:$0xff]
    %v460 = vld [vmem:[%s6 + $0xf8] sm:$0xff]
    %v461 = vld [vmem:[%s6 + $0x100] sm:$0xff]
    %v462 = vld [vmem:[%s6 + $0x108] sm:$0xff]
    %v463 = vld [vmem:[%s6 + $0x110] sm:$0xff]
    %v464 = vld [vmem:[%s6 + $0x118] sm:$0xff]
    %v465 = vld [vmem:[%s6 + $0x120] sm:$0xff]
    %v466 = vld [vmem:[%s6 + $0x128] sm:$0xff]
    %v467 = vld [vmem:[%s6 + $0x130] sm:$0xff]
    %v468 = vld [vmem:[%s6 + $0x138] sm:$0xff]
    %v469 = vld [vmem:[%s6 + $0x140] sm:$0xff]
    %v470 = vld [vmem:[%s6 + $0x148] sm:$0xff]
    %v471 = vld [vmem:[%s6 + $0x150] sm:$0xff]
    %v472 = vld [vmem:[%s6 + $0x158] sm:$0xff]
    %v473 = vld [vmem:[%s6 + $0x160] sm:$0xff]
    %v474 = vld [vmem:[%s6 + $0x168] sm:$0xff]
    %v475 = vld [vmem:[%s6 + $0x170] sm:$0xff]
    %v476 = vld [vmem:[%s6 + $0x178] sm:$0xff]
    %v477 = vld [vmem:[%s6 + $0x180] sm:$0xff]
    %v478 = vld [vmem:[%s6 + $0x188] sm:$0xff]
    %v479 = vld [vmem:[%s6 + $0x190] sm:$0xff]
    %v480 = vld [vmem:[%s6 + $0x198] sm:$0xff]
    %v481 = vld [vmem:[%s6 + $0x1a0] sm:$0xff]
    %v482 = vld [vmem:[%s6 + $0x1a8] sm:$0xff]
    %v483 = vld [vmem:[%s6 + $0x1b0] sm:$0xff]
    %v484 = vld [vmem:[%s6 + $0x1b8] sm:$0xff]
    %v485 = vld [vmem:[%s6 + $0x1c0] sm:$0xff]
    %v486 = vld [vmem:[%s6 + $0x1c8] sm:$0xff]
    %v487 = vld [vmem:[%s6 + $0x1d0] sm:$0xff]
    %v488 = vld [vmem:[%s6 + $0x1d8] sm:$0xff]
    %v489 = vld [vmem:[%s6 + $0x1e0] sm:$0xff]
    %v490 = vld [vmem:[%s6 + $0x1e8] sm:$0xff]
    %v491 = vld [vmem:[%s6 + $0x1f0] sm:$0xff]
    %v492 = vld [vmem:[%s6 + $0x1f8] sm:$0xff]
    %v493 = vld [vmem:[%s7] sm:$0xff]
    %v494 = vld [vmem:[%s7 + $0x8] sm:$0xff]
    %v495 = vld [vmem:[%s7 + $0x10] sm:$0xff]
    %v496 = vld [vmem:[%s7 + $0x18] sm:$0xff]
    %v497 = vld [vmem:[%s7 + $0x20] sm:$0xff]
    %v498 = vld [vmem:[%s7 + $0x28] sm:$0xff]
    %v499 = vld [vmem:[%s7 + $0x30] sm:$0xff]
    %v500 = vld [vmem:[%s7 + $0x38] sm:$0xff]
    %v501 = vld [vmem:[%s7 + $0x40] sm:$0xff]
    %v502 = vld [vmem:[%s7 + $0x48] sm:$0xff]
    %v503 = vld [vmem:[%s7 + $0x50] sm:$0xff]
    %v504 = vld [vmem:[%s7 + $0x58] sm:$0xff]
    %v505 = vld [vmem:[%s7 + $0x60] sm:$0xff]
    %v506 = vld [vmem:[%s7 + $0x68] sm:$0xff]
    %v507 = vld [vmem:[%s7 + $0x70] sm:$0xff]
    %v508 = vld [vmem:[%s7 + $0x78] sm:$0xff]
    %v509 = vld [vmem:[%s7 + $0x80] sm:$0xff]
    %v510 = vld [vmem:[%s7 + $0x88] sm:$0xff]
    %v511 = vld [vmem:[%s7 + $0x90] sm:$0xff]
    %v512 = vld [vmem:[%s7 + $0x98] sm:$0xff]
    %v513 = vld [vmem:[%s7 + $0xa0] sm:$0xff]
    %v514 = vld [vmem:[%s7 + $0xa8] sm:$0xff]
    %v515 = vld [vmem:[%s7 + $0xb0] sm:$0xff]
    %v516 = vld [vmem:[%s7 + $0xb8] sm:$0xff]
    %v517 = vld [vmem:[%s7 + $0xc0] sm:$0xff]
    %v518 = vld [vmem:[%s7 + $0xc8] sm:$0xff]
    %v519 = vld [vmem:[%s7 + $0xd0] sm:$0xff]
    %v520 = vld [vmem:[%s7 + $0xd8] sm:$0xff]
    %v521 = vld [vmem:[%s7 + $0xe0] sm:$0xff]
    %v522 = vld [vmem:[%s7 + $0xe8] sm:$0xff]
    %v523 = vld [vmem:[%s7 + $0xf0] sm:$0xff]
    %v524 = vld [vmem:[%s7 + $0xf8] sm:$0xff]
    %v525 = vld [vmem:[%s7 + $0x100] sm:$0xff]
    %v526 = vld [vmem:[%s7 + $0x108] sm:$0xff]
    %v527 = vld [vmem:[%s7 + $0x110] sm:$0xff]
    %v528 = vld [vmem:[%s7 + $0x118] sm:$0xff]
    %v529 = vld [vmem:[%s7 + $0x120] sm:$0xff]
    %v530 = vld [vmem:[%s7 + $0x128] sm:$0xff]
    %v531 = vld [vmem:[%s7 + $0x130] sm:$0xff]
    %v532 = vld [vmem:[%s7 + $0x138] sm:$0xff]
    %v533 = vld [vmem:[%s7 + $0x140] sm:$0xff]
    %v534 = vld [vmem:[%s7 + $0x148] sm:$0xff]
    %v535 = vld [vmem:[%s7 + $0x150] sm:$0xff]
    %v536 = vld [vmem:[%s7 + $0x158] sm:$0xff]
    %v537 = vld [vmem:[%s7 + $0x160] sm:$0xff]
    %v538 = vld [vmem:[%s7 + $0x168] sm:$0xff]
    %v539 = vld [vmem:[%s7 + $0x170] sm:$0xff]
    %v540 = vld [vmem:[%s7 + $0x178] sm:$0xff]
    %v541 = vld [vmem:[%s7 + $0x180] sm:$0xff]
    %v542 = vld [vmem:[%s7 + $0x188] sm:$0xff]
    %v543 = vld [vmem:[%s7 + $0x190] sm:$0xff]
    %v544 = vld [vmem:[%s7 + $0x198] sm:$0xff]
    %v545 = vld [vmem:[%s7 + $0x1a0] sm:$0xff]
    %v546 = vld [vmem:[%s7 + $0x1a8] sm:$0xff]
    %v547 = vld [vmem:[%s7 + $0x1b0] sm:$0xff]
    %v548 = vld [vmem:[%s7 + $0x1b8] sm:$0xff]
    %v549 = vld [vmem:[%s7 + $0x1c0] sm:$0xff]
    %v550 = vld [vmem:[%s7 + $0x1c8] sm:$0xff]
    %v551 = vld [vmem:[%s7 + $0x1d0] sm:$0xff]
    %v552 = vld [vmem:[%s7 + $0x1d8] sm:$0xff]
    %v553 = vld [vmem:[%s7 + $0x1e0] sm:$0xff]
    %v554 = vld [vmem:[%s7 + $0x1e8] sm:$0xff]
    %v555 = vld [vmem:[%s7 + $0x1f0] sm:$0xff]
    %v556 = vld [vmem:[%s7 + $0x1f8] sm:$0xff]
    %v557 = vld [vmem:[#allocation3] sm:$0x1]
    %v559 = vlaneseq
    %v560 = vshrl.u32 %v559, 7
    %v561 = vsub.s32 0, %v560
    %v562 = vrot.slane %v425, %v561
    %v563 = vlaneseq
    %v564 = vshrl.u32 %v563, 7
    %v565 = vsub.s32 1, %v564
    %v566 = vrot.slane %v425, %v565
    %v567 = vlaneseq
    %v568 = vshrl.u32 %v567, 7
    %v569 = vsub.s32 2, %v568
    %v570 = vrot.slane %v425, %v569
    %v571 = vlaneseq
    %v572 = vshrl.u32 %v571, 7
    %v573 = vsub.s32 3, %v572
    %v574 = vrot.slane %v425, %v573
    %579 = vmatprep.subr.mxu0 %v170
    %580 = vmatpush1.msra.mxu0 %v169
    %581 = vmatprep.subr.mxu0 %v174
    %582 = vmatpush1.msra.mxu0 %v173
    %583 = vmatprep.subr.mxu0 %v178
    %584 = vmatpush1.msra.mxu0 %v177
    %585 = vmatprep.subr.mxu0 %v182
    %586 = vmatpush1.msra.mxu0 %v181
    %587 = vmatprep.subr.mxu0 %v186
    %588 = vmatpush1.msra.mxu0 %v185
    %589 = vmatprep.subr.mxu0 %v190
    %590 = vmatpush1.msra.mxu0 %v189
    %591 = vmatprep.subr.mxu0 %v194
    %592 = vmatpush1.msra.mxu0 %v193
    %593 = vmatprep.subr.mxu0 %v198
    %594 = vmatpush1.msra.mxu0 %v197
    %595 = vmatprep.subr.mxu0 %v202
    %596 = vmatpush1.msra.mxu0 %v201
    %597 = vmatprep.subr.mxu0 %v206
    %598 = vmatpush1.msra.mxu0 %v205
    %599 = vmatprep.subr.mxu0 %v210
    %600 = vmatpush1.msra.mxu0 %v209
    %601 = vmatprep.subr.mxu0 %v214
    %602 = vmatpush1.msra.mxu0 %v213
    %603 = vmatprep.subr.mxu0 %v218
    %604 = vmatpush1.msra.mxu0 %v217
    %605 = vmatprep.subr.mxu0 %v222
    %606 = vmatpush1.msra.mxu0 %v221
    %607 = vmatprep.subr.mxu0 %v226
    %608 = vmatpush1.msra.mxu0 %v225
    %609 = vmatprep.subr.mxu0 %v230
    %610 = vmatpush1.msra.mxu0 %v229
    %611 = vmatprep.subr.mxu0 %v234
    %612 = vmatpush1.msra.mxu0 %v233
    %613 = vmatprep.subr.mxu0 %v238
    %614 = vmatpush1.msra.mxu0 %v237
    %615 = vmatprep.subr.mxu0 %v242
    %616 = vmatpush1.msra.mxu0 %v241
    %617 = vmatprep.subr.mxu0 %v246
    %618 = vmatpush1.msra.mxu0 %v245
    %619 = vmatprep.subr.mxu0 %v250
    %620 = vmatpush1.msra.mxu0 %v249
    %621 = vmatprep.subr.mxu0 %v254
    %622 = vmatpush1.msra.mxu0 %v253
    %623 = vmatprep.subr.mxu0 %v258
    %624 = vmatpush1.msra.mxu0 %v257
    %625 = vmatprep.subr.mxu0 %v262
    %626 = vmatpush1.msra.mxu0 %v261
    %627 = vmatprep.subr.mxu0 %v266
    %628 = vmatpush1.msra.mxu0 %v265
    %629 = vmatprep.subr.mxu0 %v270
    %630 = vmatpush1.msra.mxu0 %v269
    %631 = vmatprep.subr.mxu0 %v274
    %632 = vmatpush1.msra.mxu0 %v273
    %633 = vmatprep.subr.mxu0 %v278
    %634 = vmatpush1.msra.mxu0 %v277
    %635 = vmatprep.subr.mxu0 %v282
    %636 = vmatpush1.msra.mxu0 %v281
    %637 = vmatprep.subr.mxu0 %v286
    %638 = vmatpush1.msra.mxu0 %v285
    %639 = vmatprep.subr.mxu0 %v290
    %640 = vmatpush1.msra.mxu0 %v289
    %641 = vmatprep.subr.mxu0 %v294
    %642 = vmatpush1.msra.mxu0 %v293
    %643 = vmatprep.mubr.f32.mxu0 %v38
    %644 = vmatmul.mubr.f32.gmra.mrb[0].mxu0 %v37
    %v645 = vpop.f32.mrb[0].mxu0
    %v646 = vadd.f32 %v562, %v645
    %v647 = vpop.f32.mrb[0].mxu0
    %v648 = vadd.f32 %v566, %v647
    %649 = vdwg.mxu0
    %650 = vmatprep.subr.mxu0 %v298
    %651 = vmatpush1.msra.mxu0 %v297
    %652 = vmatprep.subr.mxu0 %v302
    %653 = vmatpush1.msra.mxu0 %v301
    %654 = vmatprep.subr.mxu0 %v306
    %655 = vmatpush1.msra.mxu0 %v305
    %656 = vmatprep.subr.mxu0 %v310
    %657 = vmatpush1.msra.mxu0 %v309
    %658 = vmatprep.subr.mxu0 %v314
    %659 = vmatpush1.msra.mxu0 %v313
    %660 = vmatprep.subr.mxu0 %v318
    %661 = vmatpush1.msra.mxu0 %v317
    %662 = vmatprep.subr.mxu0 %v322
    %663 = vmatpush1.msra.mxu0 %v321
    %664 = vmatprep.subr.mxu0 %v326
    %665 = vmatpush1.msra.mxu0 %v325
    %666 = vmatprep.subr.mxu0 %v330
    %667 = vmatpush1.msra.mxu0 %v329
    %668 = vmatprep.subr.mxu0 %v334
    %669 = vmatpush1.msra.mxu0 %v333
    %670 = vmatprep.subr.mxu0 %v338
    %671 = vmatpush1.msra.mxu0 %v337
    %672 = vmatprep.subr.mxu0 %v342
    %673 = vmatpush1.msra.mxu0 %v341
    %674 = vmatprep.subr.mxu0 %v346
    %675 = vmatpush1.msra.mxu0 %v345
    %676 = vmatprep.subr.mxu0 %v350
    %677 = vmatpush1.msra.mxu0 %v349
    %678 = vmatprep.subr.mxu0 %v354
    %679 = vmatpush1.msra.mxu0 %v353
    %680 = vmatprep.subr.mxu0 %v358
    %681 = vmatpush1.msra.mxu0 %v357
    %682 = vmatprep.subr.mxu0 %v362
    %683 = vmatpush1.msra.mxu0 %v361
    %684 = vmatprep.subr.mxu0 %v366
    %685 = vmatpush1.msra.mxu0 %v365
    %686 = vmatprep.subr.mxu0 %v370
    %687 = vmatpush1.msra.mxu0 %v369
    %688 = vmatprep.subr.mxu0 %v374
    %689 = vmatpush1.msra.mxu0 %v373
    %690 = vmatprep.subr.mxu0 %v378
    %691 = vmatpush1.msra.mxu0 %v377
    %692 = vmatprep.subr.mxu0 %v382
    %693 = vmatpush1.msra.mxu0 %v381
    %694 = vmatprep.subr.mxu0 %v386
    %695 = vmatpush1.msra.mxu0 %v385
    %696 = vmatprep.subr.mxu0 %v390
    %697 = vmatpush1.msra.mxu0 %v389
    %698 = vmatprep.subr.mxu0 %v394
    %699 = vmatpush1.msra.mxu0 %v393
    %700 = vmatprep.subr.mxu0 %v398
    %701 = vmatpush1.msra.mxu0 %v397
    %702 = vmatprep.subr.mxu0 %v402
    %703 = vmatpush1.msra.mxu0 %v401
    %704 = vmatprep.subr.mxu0 %v406
    %705 = vmatpush1.msra.mxu0 %v405
    %706 = vmatprep.subr.mxu0 %v410
    %707 = vmatpush1.msra.mxu0 %v409
    %708 = vmatprep.subr.mxu0 %v414
    %709 = vmatpush1.msra.mxu0 %v413
    %710 = vmatprep.subr.mxu0 %v418
    %711 = vmatpush1.msra.mxu0 %v417
    %712 = vmatprep.subr.mxu0 %v422
    %713 = vmatpush1.msra.mxu0 %v421
    %714 = vmatprep.mubr.f32.mxu0 %v40
    %715 = vmatmul.mubr.f32.gmra.mrb[0].mxu0 %v39
    %v716 = vpop.f32.mrb[0].mxu0
    %v717 = vadd.f32 %v646, %v716
    %v718 = vpop.f32.mrb[0].mxu0
    %v719 = vadd.f32 %v648, %v718
    %720 = vdwg.mxu0
    %721 = vmatprep.subr.mxu0 %v172
    %722 = vmatpush1.msra.mxu0 %v171
    %723 = vmatprep.subr.mxu0 %v176
    %724 = vmatpush1.msra.mxu0 %v175
    %725 = vmatprep.subr.mxu0 %v180
    %726 = vmatpush1.msra.mxu0 %v179
    %727 = vmatprep.subr.mxu0 %v184
    %728 = vmatpush1.msra.mxu0 %v183
    %729 = vmatprep.subr.mxu0 %v188
    %730 = vmatpush1.msra.mxu0 %v187
    %731 = vmatprep.subr.mxu0 %v192
    %732 = vmatpush1.msra.mxu0 %v191
    %733 = vmatprep.subr.mxu0 %v196
    %734 = vmatpush1.msra.mxu0 %v195
    %735 = vmatprep.subr.mxu0 %v200
    %736 = vmatpush1.msra.mxu0 %v199
    %737 = vmatprep.subr.mxu0 %v204
    %738 = vmatpush1.msra.mxu0 %v203
    %739 = vmatprep.subr.mxu0 %v208
    %740 = vmatpush1.msra.mxu0 %v207
    %741 = vmatprep.subr.mxu0 %v212
    %742 = vmatpush1.msra.mxu0 %v211
    %743 = vmatprep.subr.mxu0 %v216
    %744 = vmatpush1.msra.mxu0 %v215
    %745 = vmatprep.subr.mxu0 %v220
    %746 = vmatpush1.msra.mxu0 %v219
    %747 = vmatprep.subr.mxu0 %v224
    %748 = vmatpush1.msra.mxu0 %v223
    %749 = vmatprep.subr.mxu0 %v228
    %750 = vmatpush1.msra.mxu0 %v227
    %751 = vmatprep.subr.mxu0 %v232
    %752 = vmatpush1.msra.mxu0 %v231
    %753 = vmatprep.subr.mxu0 %v236
    %754 = vmatpush1.msra.mxu0 %v235
    %755 = vmatprep.subr.mxu0 %v240
    %756 = vmatpush1.msra.mxu0 %v239
    %757 = vmatprep.subr.mxu0 %v244
    %758 = vmatpush1.msra.mxu0 %v243
    %759 = vmatprep.subr.mxu0 %v248
    %760 = vmatpush1.msra.mxu0 %v247
    %761 = vmatprep.subr.mxu0 %v252
    %762 = vmatpush1.msra.mxu0 %v251
    %763 = vmatprep.subr.mxu0 %v256
    %764 = vmatpush1.msra.mxu0 %v255
    %765 = vmatprep.subr.mxu0 %v260
    %766 = vmatpush1.msra.mxu0 %v259
    %767 = vmatprep.subr.mxu0 %v264
    %768 = vmatpush1.msra.mxu0 %v263
    %769 = vmatprep.subr.mxu0 %v268
    %770 = vmatpush1.msra.mxu0 %v267
    %771 = vmatprep.subr.mxu0 %v272
    %772 = vmatpush1.msra.mxu0 %v271
    %773 = vmatprep.subr.mxu0 %v276
    %774 = vmatpush1.msra.mxu0 %v275
    %775 = vmatprep.subr.mxu0 %v280
    %776 = vmatpush1.msra.mxu0 %v279
    %777 = vmatprep.subr.mxu0 %v284
    %778 = vmatpush1.msra.mxu0 %v283
    %779 = vmatprep.subr.mxu0 %v288
    %780 = vmatpush1.msra.mxu0 %v287
    %781 = vmatprep.subr.mxu0 %v292
    %782 = vmatpush1.msra.mxu0 %v291
    %783 = vmatprep.subr.mxu0 %v296
    %784 = vmatpush1.msra.mxu0 %v295
    %785 = vmatprep.mubr.f32.mxu0 %v38
    %786 = vmatmul.mubr.f32.gmra.mrb[0].mxu0 %v37
    %v787 = vpop.f32.mrb[0].mxu0
    %v788 = vadd.f32 %v570, %v787
    %v789 = vpop.f32.mrb[0].mxu0
    %v790 = vadd.f32 %v574, %v789
    %791 = vdwg.mxu0
    %792 = vmatprep.subr.mxu0 %v300
    %793 = vmatpush1.msra.mxu0 %v299
    %794 = vmatprep.subr.mxu0 %v304
    %795 = vmatpush1.msra.mxu0 %v303
    %796 = vmatprep.subr.mxu0 %v308
    %797 = vmatpush1.msra.mxu0 %v307
    %798 = vmatprep.subr.mxu0 %v312
    %799 = vmatpush1.msra.mxu0 %v311
    %800 = vmatprep.subr.mxu0 %v316
    %801 = vmatpush1.msra.mxu0 %v315
    %802 = vmatprep.subr.mxu0 %v320
    %803 = vmatpush1.msra.mxu0 %v319
    %804 = vmatprep.subr.mxu0 %v324
    %805 = vmatpush1.msra.mxu0 %v323
    %806 = vmatprep.subr.mxu0 %v328
    %807 = vmatpush1.msra.mxu0 %v327
    %808 = vmatprep.subr.mxu0 %v332
    %809 = vmatpush1.msra.mxu0 %v331
    %810 = vmatprep.subr.mxu0 %v336
    %811 = vmatpush1.msra.mxu0 %v335
    %812 = vmatprep.subr.mxu0 %v340
    %813 = vmatpush1.msra.mxu0 %v339
    %814 = vmatprep.subr.mxu0 %v344
    %815 = vmatpush1.msra.mxu0 %v343
    %816 = vmatprep.subr.mxu0 %v348
    %817 = vmatpush1.msra.mxu0 %v347
    %818 = vmatprep.subr.mxu0 %v352
    %819 = vmatpush1.msra.mxu0 %v351
    %820 = vmatprep.subr.mxu0 %v356
    %821 = vmatpush1.msra.mxu0 %v355
    %822 = vmatprep.subr.mxu0 %v360
    %823 = vmatpush1.msra.mxu0 %v359
    %824 = vmatprep.subr.mxu0 %v364
    %825 = vmatpush1.msra.mxu0 %v363
    %826 = vmatprep.subr.mxu0 %v368
    %827 = vmatpush1.msra.mxu0 %v367
    %828 = vmatprep.subr.mxu0 %v372
    %829 = vmatpush1.msra.mxu0 %v371
    %830 = vmatprep.subr.mxu0 %v376
    %831 = vmatpush1.msra.mxu0 %v375
    %832 = vmatprep.subr.mxu0 %v380
    %833 = vmatpush1.msra.mxu0 %v379
    %834 = vmatprep.subr.mxu0 %v384
    %835 = vmatpush1.msra.mxu0 %v383
    %836 = vmatprep.subr.mxu0 %v388
    %837 = vmatpush1.msra.mxu0 %v387
    %838 = vmatprep.subr.mxu0 %v392
    %839 = vmatpush1.msra.mxu0 %v391
    %840 = vmatprep.subr.mxu0 %v396
    %841 = vmatpush1.msra.mxu0 %v395
    %842 = vmatprep.subr.mxu0 %v400
    %843 = vmatpush1.msra.mxu0 %v399
    %844 = vmatprep.subr.mxu0 %v404
    %845 = vmatpush1.msra.mxu0 %v403
    %846 = vmatprep.subr.mxu0 %v408
    %847 = vmatpush1.msra.mxu0 %v407
    %848 = vmatprep.subr.mxu0 %v412
    %849 = vmatpush1.msra.mxu0 %v411
    %850 = vmatprep.subr.mxu0 %v416
    %851 = vmatpush1.msra.mxu0 %v415
    %852 = vmatprep.subr.mxu0 %v420
    %853 = vmatpush1.msra.mxu0 %v419
    %854 = vmatprep.subr.mxu0 %v424
    %855 = vmatpush1.msra.mxu0 %v423
    %856 = vmatprep.mubr.f32.mxu0 %v40
    %857 = vmatmul.mubr.f32.gmra.mrb[0].mxu0 %v39
    %v858 = vpop.f32.mrb[0].mxu0
    %v859 = vadd.f32 %v788, %v858
    %v860 = vpop.f32.mrb[0].mxu0
    %v861 = vadd.f32 %v790, %v860
    %862 = vdwg.mxu0
    %v863 = vrot.slane %v717, 4
    %v864 = vadd.f32 %v717, %v863
    %v865 = vrot.slane %v864, 2
    %v866 = vadd.f32 %v864, %v865
    %v867 = vrot.slane %v866, 1
    %v868 = vadd.f32 %v866, %v867
    %v869 = vrot.slane %v719, 4
    %v870 = vadd.f32 %v719, %v869
    %v871 = vrot.slane %v870, 2
    %v872 = vadd.f32 %v870, %v871
    %v873 = vrot.slane %v872, 1
    %v874 = vadd.f32 %v872, %v873
    %v875 = vrot.slane %v859, 4
    %v876 = vadd.f32 %v859, %v875
    %v877 = vrot.slane %v876, 2
    %v878 = vadd.f32 %v876, %v877
    %v879 = vrot.slane %v878, 1
    %v880 = vadd.f32 %v878, %v879
    %v881 = vrot.slane %v861, 4
    %v882 = vadd.f32 %v861, %v881
    %v883 = vrot.slane %v882, 2
    %v884 = vadd.f32 %v882, %v883
    %v885 = vrot.slane %v884, 1
    %v886 = vadd.f32 %v884, %v885
    %v887 = vmul.f32 %v868, 0.125
    %v888 = vmul.f32 %v874, 0.125
    %v889 = vmul.f32 %v880, 0.125
    %v890 = vmul.f32 %v886, 0.125
    %v891 = vmul.f32 %v717, %v717
    %v892 = vmul.f32 %v719, %v719
    %v893 = vmul.f32 %v859, %v859
    %v894 = vmul.f32 %v861, %v861
    %v895 = vrot.slane %v891, 4
    %v896 = vadd.f32 %v891, %v895
    %v897 = vrot.slane %v896, 2
    %v898 = vadd.f32 %v896, %v897
    %v899 = vrot.slane %v898, 1
    %v900 = vadd.f32 %v898, %v899
    %v901 = vrot.slane %v892, 4
    %v902 = vadd.f32 %v892, %v901
    %v903 = vrot.slane %v902, 2
    %v904 = vadd.f32 %v902, %v903
    %v905 = vrot.slane %v904, 1
    %v906 = vadd.f32 %v904, %v905
    %v907 = vrot.slane %v893, 4
    %v908 = vadd.f32 %v893, %v907
    %v909 = vrot.slane %v908, 2
    %v910 = vadd.f32 %v908, %v909
    %v911 = vrot.slane %v910, 1
    %v912 = vadd.f32 %v910, %v911
    %v913 = vrot.slane %v894, 4
    %v914 = vadd.f32 %v894, %v913
    %v915 = vrot.slane %v914, 2
    %v916 = vadd.f32 %v914, %v915
    %v917 = vrot.slane %v916, 1
    %v918 = vadd.f32 %v916, %v917
    %v919 = vmul.f32 %v900, 0.125
    %v920 = vmul.f32 %v906, 0.125
    %v921 = vmul.f32 %v912, 0.125
    %v922 = vmul.f32 %v918, 0.125
    %v923 = vmul.f32 %v887, %v887
    %v924 = vmul.f32 %v888, %v888
    %v925 = vmul.f32 %v889, %v889
    %v926 = vmul.f32 %v890, %v890
    %v927 = vsub.f32 %v919, %v923
    %v928 = vsub.f32 %v920, %v924
    %v929 = vsub.f32 %v921, %v925
    %v930 = vsub.f32 %v922, %v926
    %v931 = vsub.f32 %v717, %v887
    %v932 = vsub.f32 %v719, %v888
    %v933 = vsub.f32 %v859, %v889
    %v934 = vsub.f32 %v861, %v890
    %v935 = vadd.f32 %v927, 1e-05
    %v936 = vadd.f32 %v928, 1e-05
    %v937 = vadd.f32 %v929, 1e-05
    %v938 = vadd.f32 %v930, 1e-05
    %v939 = vrsqrt.pop %v935
    %v940 = vrsqrt.pop %v936
    %v941 = vrsqrt.pop %v937
    %v942 = vrsqrt.pop %v938
    %v943 = vmul.f32 %v931, %v939
    %v944 = vmul.f32 %v932, %v940
    %v945 = vmul.f32 %v933, %v941
    %v946 = vmul.f32 %v934, %v942
    %v948 = vlaneseq
    %v949 = vshrl.u32 %v948, 7
    %v950 = vsub.s32 0, %v949
    %v951 = vrot.slane %v426, %v950
    %v952 = vlaneseq
    %v953 = vshrl.u32 %v952, 7
    %v954 = vsub.s32 1, %v953
    %v955 = vrot.slane %v426, %v954
    %v956 = vlaneseq
    %v957 = vshrl.u32 %v956, 7
    %v958 = vsub.s32 2, %v957
    %v959 = vrot.slane %v426, %v958
    %v960 = vlaneseq
    %v961 = vshrl.u32 %v960, 7
    %v962 = vsub.s32 3, %v961
    %v963 = vrot.slane %v426, %v962
    %v968 = vmul.f32 %v943, %v951
    %v969 = vmul.f32 %v944, %v955
    %v970 = vmul.f32 %v945, %v959
    %v971 = vmul.f32 %v946, %v963
    %v973 = vlaneseq
    %v974 = vshrl.u32 %v973, 7
    %v975 = vsub.s32 0, %v974
    %v976 = vrot.slane %v427, %v975
    %v977 = vlaneseq
    %v978 = vshrl.u32 %v977, 7
    %v979 = vsub.s32 1, %v978
    %v980 = vrot.slane %v427, %v979
    %v981 = vlaneseq
    %v982 = vshrl.u32 %v981, 7
    %v983 = vsub.s32 2, %v982
    %v984 = vrot.slane %v427, %v983
    %v985 = vlaneseq
    %v986 = vshrl.u32 %v985, 7
    %v987 = vsub.s32 3, %v986
    %v988 = vrot.slane %v427, %v987
    %v993 = vadd.f32 %v968, %v976
    %v994 = vadd.f32 %v969, %v980
    %v995 = vadd.f32 %v970, %v984
    %v996 = vadd.f32 %v971, %v988
    %vm997 = vcmp.ge.f32.partialorder %v993, 0.0
    %vm998 = vcmp.ge.f32.partialorder %v994, 0.0
    %vm999 = vcmp.ge.f32.partialorder %v995, 0.0
    %vm1000 = vcmp.ge.f32.partialorder %v996, 0.0
    %v1002 = vlaneseq
    %v1003 = vshrl.u32 %v1002, 7
    %v1004 = vsub.s32 0, %v1003
    %v1005 = vrot.slane %v428, %v1004
    %1006 = vset.pattern.permute.xlu0 0
    %1007 = vperm.xlu0 %1006, %v1005
    %v1008 = vpop.permute.xlu0 %1007
    %v1010 = vmul.f32 %v1008, %v993
    %v1011 = vmul.f32 %v1008, %v994
    %v1012 = vmul.f32 %v1008, %v995
    %v1013 = vmul.f32 %v1008, %v996
    %v1014 = vsel %vm997, %v993, %v1010
    %v1015 = vsel %vm998, %v994, %v1011
    %v1016 = vsel %vm999, %v995, %v1012
    %v1017 = vsel %vm1000, %v996, %v1013
    %1018 = vmatprep.subr.mxu0 0.0
    %1019 = vmatpush1.msra.mxu0 %v493
    %1020 = vmatprep.subr.mxu0 0.0
    %1021 = vmatpush1.msra.mxu0 %v494
    %1022 = vmatprep.subr.mxu0 0.0
    %1023 = vmatpush1.msra.mxu0 %v495
    %1024 = vmatprep.subr.mxu0 0.0
    %1025 = vmatpush1.msra.mxu0 %v496
    %1026 = vmatprep.subr.mxu0 0.0
    %1027 = vmatpush1.msra.mxu0 %v497
    %1028 = vmatprep.subr.mxu0 0.0
    %1029 = vmatpush1.msra.mxu0 %v498
    %1030 = vmatprep.subr.mxu0 0.0
    %1031 = vmatpush1.msra.mxu0 %v499
    %1032 = vmatprep.subr.mxu0 0.0
    %1033 = vmatpush1.msra.mxu0 %v500
    %1034 = vmatprep.subr.mxu0 0.0
    %1035 = vmatpush1.msra.mxu0 %v501
    %1036 = vmatprep.subr.mxu0 0.0
    %1037 = vmatpush1.msra.mxu0 %v502
    %1038 = vmatprep.subr.mxu0 0.0
    %1039 = vmatpush1.msra.mxu0 %v503
    %1040 = vmatprep.subr.mxu0 0.0
    %1041 = vmatpush1.msra.mxu0 %v504
    %1042 = vmatprep.subr.mxu0 0.0
    %1043 = vmatpush1.msra.mxu0 %v505
    %1044 = vmatprep.subr.mxu0 0.0
    %1045 = vmatpush1.msra.mxu0 %v506
    %1046 = vmatprep.subr.mxu0 0.0
    %1047 = vmatpush1.msra.mxu0 %v507
    %1048 = vmatprep.subr.mxu0 0.0
    %1049 = vmatpush1.msra.mxu0 %v508
    %1050 = vmatprep.subr.mxu0 0.0
    %1051 = vmatpush1.msra.mxu0 %v509
    %1052 = vmatprep.subr.mxu0 0.0
    %1053 = vmatpush1.msra.mxu0 %v510
    %1054 = vmatprep.subr.mxu0 0.0
    %1055 = vmatpush1.msra.mxu0 %v511
    %1056 = vmatprep.subr.mxu0 0.0
    %1057 = vmatpush1.msra.mxu0 %v512
    %1058 = vmatprep.subr.mxu0 0.0
    %1059 = vmatpush1.msra.mxu0 %v513
    %1060 = vmatprep.subr.mxu0 0.0
    %1061 = vmatpush1.msra.mxu0 %v514
    %1062 = vmatprep.subr.mxu0 0.0
    %1063 = vmatpush1.msra.mxu0 %v515
    %1064 = vmatprep.subr.mxu0 0.0
    %1065 = vmatpush1.msra.mxu0 %v516
    %1066 = vmatprep.subr.mxu0 0.0
    %1067 = vmatpush1.msra.mxu0 %v517
    %1068 = vmatprep.subr.mxu0 0.0
    %1069 = vmatpush1.msra.mxu0 %v518
    %1070 = vmatprep.subr.mxu0 0.0
    %1071 = vmatpush1.msra.mxu0 %v519
    %1072 = vmatprep.subr.mxu0 0.0
    %1073 = vmatpush1.msra.mxu0 %v520
    %1074 = vmatprep.subr.mxu0 0.0
    %1075 = vmatpush1.msra.mxu0 %v521
    %1076 = vmatprep.subr.mxu0 0.0
    %1077 = vmatpush1.msra.mxu0 %v522
    %1078 = vmatprep.subr.mxu0 0.0
    %1079 = vmatpush1.msra.mxu0 %v523
    %1080 = vmatprep.subr.mxu0 0.0
    %1081 = vmatpush1.msra.mxu0 %v524
    %1082 = vmatprep.mubr.f32.mxu0 %v1015
    %1083 = vmatmul.mubr.f32.gmra.mrb[0].mxu0 %v1014
    %v1084 = vpop.f32.mrb[0].mxu0
    %v1085 = vadd.f32 0.0, %v1084
    %v1086 = vpop.f32.mrb[0].mxu0
    %1087 = vdwg.mxu0
    %1088 = vmatprep.subr.mxu0 0.0
    %1089 = vmatpush1.msra.mxu0 %v525
    %1090 = vmatprep.subr.mxu0 0.0
    %1091 = vmatpush1.msra.mxu0 %v526
    %1092 = vmatprep.subr.mxu0 0.0
    %1093 = vmatpush1.msra.mxu0 %v527
    %1094 = vmatprep.subr.mxu0 0.0
    %1095 = vmatpush1.msra.mxu0 %v528
    %1096 = vmatprep.subr.mxu0 0.0
    %1097 = vmatpush1.msra.mxu0 %v529
    %1098 = vmatprep.subr.mxu0 0.0
    %1099 = vmatpush1.msra.mxu0 %v530
    %1100 = vmatprep.subr.mxu0 0.0
    %1101 = vmatpush1.msra.mxu0 %v531
    %1102 = vmatprep.subr.mxu0 0.0
    %1103 = vmatpush1.msra.mxu0 %v532
    %1104 = vmatprep.subr.mxu0 0.0
    %1105 = vmatpush1.msra.mxu0 %v533
    %1106 = vmatprep.subr.mxu0 0.0
    %1107 = vmatpush1.msra.mxu0 %v534
    %1108 = vmatprep.subr.mxu0 0.0
    %1109 = vmatpush1.msra.mxu0 %v535
    %1110 = vmatprep.subr.mxu0 0.0
    %1111 = vmatpush1.msra.mxu0 %v536
    %1112 = vmatprep.subr.mxu0 0.0
    %1113 = vmatpush1.msra.mxu0 %v537
    %1114 = vmatprep.subr.mxu0 0.0
    %1115 = vmatpush1.msra.mxu0 %v538
    %1116 = vmatprep.subr.mxu0 0.0
    %1117 = vmatpush1.msra.mxu0 %v539
    %1118 = vmatprep.subr.mxu0 0.0
    %1119 = vmatpush1.msra.mxu0 %v540
    %1120 = vmatprep.subr.mxu0 0.0
    %1121 = vmatpush1.msra.mxu0 %v541
    %1122 = vmatprep.subr.mxu0 0.0
    %1123 = vmatpush1.msra.mxu0 %v542
    %1124 = vmatprep.subr.mxu0 0.0
    %1125 = vmatpush1.msra.mxu0 %v543
    %1126 = vmatprep.subr.mxu0 0.0
    %1127 = vmatpush1.msra.mxu0 %v544
    %1128 = vmatprep.subr.mxu0 0.0
    %1129 = vmatpush1.msra.mxu0 %v545
    %1130 = vmatprep.subr.mxu0 0.0
    %1131 = vmatpush1.msra.mxu0 %v546
    %1132 = vmatprep.subr.mxu0 0.0
    %1133 = vmatpush1.msra.mxu0 %v547
    %1134 = vmatprep.subr.mxu0 0.0
    %1135 = vmatpush1.msra.mxu0 %v548
    %1136 = vmatprep.subr.mxu0 0.0
    %1137 = vmatpush1.msra.mxu0 %v549
    %1138 = vmatprep.subr.mxu0 0.0
    %1139 = vmatpush1.msra.mxu0 %v550
    %1140 = vmatprep.subr.mxu0 0.0
    %1141 = vmatpush1.msra.mxu0 %v551
    %1142 = vmatprep.subr.mxu0 0.0
    %1143 = vmatpush1.msra.mxu0 %v552
    %1144 = vmatprep.subr.mxu0 0.0
    %1145 = vmatpush1.msra.mxu0 %v553
    %1146 = vmatprep.subr.mxu0 0.0
    %1147 = vmatpush1.msra.mxu0 %v554
    %1148 = vmatprep.subr.mxu0 0.0
    %1149 = vmatpush1.msra.mxu0 %v555
    %1150 = vmatprep.subr.mxu0 0.0
    %1151 = vmatpush1.msra.mxu0 %v556
    %1152 = vmatprep.mubr.f32.mxu0 %v1017
    %1153 = vmatmul.mubr.f32.gmra.mrb[0].mxu0 %v1016
    %v1154 = vpop.f32.mrb[0].mxu0
    %v1155 = vadd.f32 %v1085, %v1154
    %v1156 = vpop.f32.mrb[0].mxu0
    %1157 = vdwg.mxu0
    %1158 = vmatprep.subr.mxu0 0.0
    %1159 = vmatpush1.msra.mxu0 %v429
    %1160 = vmatprep.subr.mxu0 0.0
    %1161 = vmatpush1.msra.mxu0 %v430
    %1162 = vmatprep.subr.mxu0 0.0
    %1163 = vmatpush1.msra.mxu0 %v431
    %1164 = vmatprep.subr.mxu0 0.0
    %1165 = vmatpush1.msra.mxu0 %v432
    %1166 = vmatprep.subr.mxu0 0.0
    %1167 = vmatpush1.msra.mxu0 %v433
    %1168 = vmatprep.subr.mxu0 0.0
    %1169 = vmatpush1.msra.mxu0 %v434
    %1170 = vmatprep.subr.mxu0 0.0
    %1171 = vmatpush1.msra.mxu0 %v435
    %1172 = vmatprep.subr.mxu0 0.0
    %1173 = vmatpush1.msra.mxu0 %v436
    %1174 = vmatprep.subr.mxu0 0.0
    %1175 = vmatpush1.msra.mxu0 %v437
    %1176 = vmatprep.subr.mxu0 0.0
    %1177 = vmatpush1.msra.mxu0 %v438
    %1178 = vmatprep.subr.mxu0 0.0
    %1179 = vmatpush1.msra.mxu0 %v439
    %1180 = vmatprep.subr.mxu0 0.0
    %1181 = vmatpush1.msra.mxu0 %v440
    %1182 = vmatprep.subr.mxu0 0.0
    %1183 = vmatpush1.msra.mxu0 %v441
    %1184 = vmatprep.subr.mxu0 0.0
    %1185 = vmatpush1.msra.mxu0 %v442
    %1186 = vmatprep.subr.mxu0 0.0
    %1187 = vmatpush1.msra.mxu0 %v443
    %1188 = vmatprep.subr.mxu0 0.0
    %1189 = vmatpush1.msra.mxu0 %v444
    %1190 = vmatprep.subr.mxu0 0.0
    %1191 = vmatpush1.msra.mxu0 %v445
    %1192 = vmatprep.subr.mxu0 0.0
    %1193 = vmatpush1.msra.mxu0 %v446
    %1194 = vmatprep.subr.mxu0 0.0
    %1195 = vmatpush1.msra.mxu0 %v447
    %1196 = vmatprep.subr.mxu0 0.0
    %1197 = vmatpush1.msra.mxu0 %v448
    %1198 = vmatprep.subr.mxu0 0.0
    %1199 = vmatpush1.msra.mxu0 %v449
    %1200 = vmatprep.subr.mxu0 0.0
    %1201 = vmatpush1.msra.mxu0 %v450
    %1202 = vmatprep.subr.mxu0 0.0
    %1203 = vmatpush1.msra.mxu0 %v451
    %1204 = vmatprep.subr.mxu0 0.0
    %1205 = vmatpush1.msra.mxu0 %v452
    %1206 = vmatprep.subr.mxu0 0.0
    %1207 = vmatpush1.msra.mxu0 %v453
    %1208 = vmatprep.subr.mxu0 0.0
    %1209 = vmatpush1.msra.mxu0 %v454
    %1210 = vmatprep.subr.mxu0 0.0
    %1211 = vmatpush1.msra.mxu0 %v455
    %1212 = vmatprep.subr.mxu0 0.0
    %1213 = vmatpush1.msra.mxu0 %v456
    %1214 = vmatprep.subr.mxu0 0.0
    %1215 = vmatpush1.msra.mxu0 %v457
    %1216 = vmatprep.subr.mxu0 0.0
    %1217 = vmatpush1.msra.mxu0 %v458
    %1218 = vmatprep.subr.mxu0 0.0
    %1219 = vmatpush1.msra.mxu0 %v459
    %1220 = vmatprep.subr.mxu0 0.0
    %1221 = vmatpush1.msra.mxu0 %v460
    %1222 = vmatprep.mubr.f32.mxu0 %v38
    %1223 = vmatmul.mubr.f32.gmra.mrb[0].mxu0 %v37
    %v1224 = vpop.f32.mrb[0].mxu0
    %v1225 = vadd.f32 %v1155, %v1224
    %v1226 = vpop.f32.mrb[0].mxu0
    %1227 = vdwg.mxu0
    %1228 = vmatprep.subr.mxu0 0.0
    %1229 = vmatpush1.msra.mxu0 %v461
    %1230 = vmatprep.subr.mxu0 0.0
    %1231 = vmatpush1.msra.mxu0 %v462
    %1232 = vmatprep.subr.mxu0 0.0
    %1233 = vmatpush1.msra.mxu0 %v463
    %1234 = vmatprep.subr.mxu0 0.0
    %1235 = vmatpush1.msra.mxu0 %v464
    %1236 = vmatprep.subr.mxu0 0.0
    %1237 = vmatpush1.msra.mxu0 %v465
    %1238 = vmatprep.subr.mxu0 0.0
    %1239 = vmatpush1.msra.mxu0 %v466
    %1240 = vmatprep.subr.mxu0 0.0
    %1241 = vmatpush1.msra.mxu0 %v467
    %1242 = vmatprep.subr.mxu0 0.0
    %1243 = vmatpush1.msra.mxu0 %v468
    %1244 = vmatprep.subr.mxu0 0.0
    %1245 = vmatpush1.msra.mxu0 %v469
    %1246 = vmatprep.subr.mxu0 0.0
    %1247 = vmatpush1.msra.mxu0 %v470
    %1248 = vmatprep.subr.mxu0 0.0
    %1249 = vmatpush1.msra.mxu0 %v471
    %1250 = vmatprep.subr.mxu0 0.0
    %1251 = vmatpush1.msra.mxu0 %v472
    %1252 = vmatprep.subr.mxu0 0.0
    %1253 = vmatpush1.msra.mxu0 %v473
    %1254 = vmatprep.subr.mxu0 0.0
    %1255 = vmatpush1.msra.mxu0 %v474
    %1256 = vmatprep.subr.mxu0 0.0
    %1257 = vmatpush1.msra.mxu0 %v475
    %1258 = vmatprep.subr.mxu0 0.0
    %1259 = vmatpush1.msra.mxu0 %v476
    %1260 = vmatprep.subr.mxu0 0.0
    %1261 = vmatpush1.msra.mxu0 %v477
    %1262 = vmatprep.subr.mxu0 0.0
    %1263 = vmatpush1.msra.mxu0 %v478
    %1264 = vmatprep.subr.mxu0 0.0
    %1265 = vmatpush1.msra.mxu0 %v479
    %1266 = vmatprep.subr.mxu0 0.0
    %1267 = vmatpush1.msra.mxu0 %v480
    %1268 = vmatprep.subr.mxu0 0.0
    %1269 = vmatpush1.msra.mxu0 %v481
    %1270 = vmatprep.subr.mxu0 0.0
    %1271 = vmatpush1.msra.mxu0 %v482
    %1272 = vmatprep.subr.mxu0 0.0
    %1273 = vmatpush1.msra.mxu0 %v483
    %1274 = vmatprep.subr.mxu0 0.0
    %1275 = vmatpush1.msra.mxu0 %v484
    %1276 = vmatprep.subr.mxu0 0.0
    %1277 = vmatpush1.msra.mxu0 %v485
    %1278 = vmatprep.subr.mxu0 0.0
    %1279 = vmatpush1.msra.mxu0 %v486
    %1280 = vmatprep.subr.mxu0 0.0
    %1281 = vmatpush1.msra.mxu0 %v487
    %1282 = vmatprep.subr.mxu0 0.0
    %1283 = vmatpush1.msra.mxu0 %v488
    %1284 = vmatprep.subr.mxu0 0.0
    %1285 = vmatpush1.msra.mxu0 %v489
    %1286 = vmatprep.subr.mxu0 0.0
    %1287 = vmatpush1.msra.mxu0 %v490
    %1288 = vmatprep.subr.mxu0 0.0
    %1289 = vmatpush1.msra.mxu0 %v491
    %1290 = vmatprep.subr.mxu0 0.0
    %1291 = vmatpush1.msra.mxu0 %v492
    %1292 = vmatprep.mubr.f32.mxu0 %v40
    %1293 = vmatmul.mubr.f32.gmra.mrb[0].mxu0 %v39
    %v1294 = vpop.f32.mrb[0].mxu0
    %v1295 = vadd.f32 %v1225, %v1294
    %v1296 = vpop.f32.mrb[0].mxu0
    %1297 = vdwg.mxu0
    %v1299 = vlaneseq
    %v1300 = vshrl.u32 %v1299, 7
    %v1301 = vsub.s32 0, %v1300
    %v1302 = vrot.slane %v557, %v1301
    %v1304 = vadd.f32 %v1295, %v1302
    %v1305 = vxor.u32 %v1304, 2147483648
    %v1306 = vmul.f32 %v1305, 1.442695
    %v1307 = vpow.pop %v1306
    %v1308 = vadd.f32 %v1307, 1.0
    %v1309 = vrcp.pop %v1308
    %v1310 = vmul.f32 1.0, %v1309
    %1312 = vset.pattern.permute.xlu0 0
    %1313 = vperm.xlu0 %1312, %v1310
    %v1314 = vpop.permute.xlu0 %1313
    %v1316 = vmul.f32 %v1014, %v1314
    %v1317 = vmul.f32 %v1015, %v1314
    %v1318 = vmul.f32 %v1016, %v1314
    %v1319 = vmul.f32 %v1017, %v1314
    %v1320 = vsub.f32 %v37, %v1316
    %v1321 = vsub.f32 %v38, %v1317
    %v1322 = vsub.f32 %v39, %v1318
    %v1323 = vsub.f32 %v40, %v1319
    %1324 = vmatprep.subr.mxu0 %v170
    %1325 = vmatpush1.msra.mxu0 %v169
    %1326 = vmatprep.subr.mxu0 %v174
    %1327 = vmatpush1.msra.mxu0 %v173
    %1328 = vmatprep.subr.mxu0 %v178
    %1329 = vmatpush1.msra.mxu0 %v177
    %1330 = vmatprep.subr.mxu0 %v182
    %1331 = vmatpush1.msra.mxu0 %v181
    %1332 = vmatprep.subr.mxu0 %v186
    %1333 = vmatpush1.msra.mxu0 %v185
    %1334 = vmatprep.subr.mxu0 %v190
    %1335 = vmatpush1.msra.mxu0 %v189
    %1336 = vmatprep.subr.mxu0 %v194
    %1337 = vmatpush1.msra.mxu0 %v193
    %1338 = vmatprep.subr.mxu0 %v198
    %1339 = vmatpush1.msra.mxu0 %v197
    %1340 = vmatprep.subr.mxu0 %v202
    %1341 = vmatpush1.msra.mxu0 %v201
    %1342 = vmatprep.subr.mxu0 %v206
    %1343 = vmatpush1.msra.mxu0 %v205
    %1344 = vmatprep.subr.mxu0 %v210
    %1345 = vmatpush1.msra.mxu0 %v209
    %1346 = vmatprep.subr.mxu0 %v214
    %1347 = vmatpush1.msra.mxu0 %v213
    %1348 = vmatprep.subr.mxu0 %v218
    %1349 = vmatpush1.msra.mxu0 %v217
    %1350 = vmatprep.subr.mxu0 %v222
    %1351 = vmatpush1.msra.mxu0 %v221
    %1352 = vmatprep.subr.mxu0 %v226
    %1353 = vmatpush1.msra.mxu0 %v225
    %1354 = vmatprep.subr.mxu0 %v230
    %1355 = vmatpush1.msra.mxu0 %v229
    %1356 = vmatprep.subr.mxu0 %v234
    %1357 = vmatpush1.msra.mxu0 %v233
    %1358 = vmatprep.subr.mxu0 %v238
    %1359 = vmatpush1.msra.mxu0 %v237
    %1360 = vmatprep.subr.mxu0 %v242
    %1361 = vmatpush1.msra.mxu0 %v241
    %1362 = vmatprep.subr.mxu0 %v246
    %1363 = vmatpush1.msra.mxu0 %v245
    %1364 = vmatprep.subr.mxu0 %v250
    %1365 = vmatpush1.msra.mxu0 %v249
    %1366 = vmatprep.subr.mxu0 %v254
    %1367 = vmatpush1.msra.mxu0 %v253
    %1368 = vmatprep.subr.mxu0 %v258
    %1369 = vmatpush1.msra.mxu0 %v257
    %1370 = vmatprep.subr.mxu0 %v262
    %1371 = vmatpush1.msra.mxu0 %v261
    %1372 = vmatprep.subr.mxu0 %v266
    %1373 = vmatpush1.msra.mxu0 %v265
    %1374 = vmatprep.subr.mxu0 %v270
    %1375 = vmatpush1.msra.mxu0 %v269
    %1376 = vmatprep.subr.mxu0 %v274
    %1377 = vmatpush1.msra.mxu0 %v273
    %1378 = vmatprep.subr.mxu0 %v278
    %1379 = vmatpush1.msra.mxu0 %v277
    %1380 = vmatprep.subr.mxu0 %v282
    %1381 = vmatpush1.msra.mxu0 %v281
    %1382 = vmatprep.subr.mxu0 %v286
    %1383 = vmatpush1.msra.mxu0 %v285
    %1384 = vmatprep.subr.mxu0 %v290
    %1385 = vmatpush1.msra.mxu0 %v289
    %1386 = vmatprep.subr.mxu0 %v294
    %1387 = vmatpush1.msra.mxu0 %v293
    %1388 = vmatprep.mubr.f32.mxu0 %v1321
    %1389 = vmatmul.mubr.f32.gmra.mrb[0].mxu0 %v1320
    %v1390 = vpop.f32.mrb[0].mxu0
    %v1391 = vadd.f32 %v562, %v1390
    %v1392 = vpop.f32.mrb[0].mxu0
    %v1393 = vadd.f32 %v566, %v1392
    %1394 = vdwg.mxu0
    %1395 = vmatprep.subr.mxu0 %v298
    %1396 = vmatpush1.msra.mxu0 %v297
    %1397 = vmatprep.subr.mxu0 %v302
    %1398 = vmatpush1.msra.mxu0 %v301
    %1399 = vmatprep.subr.mxu0 %v306
    %1400 = vmatpush1.msra.mxu0 %v305
    %1401 = vmatprep.subr.mxu0 %v310
    %1402 = vmatpush1.msra.mxu0 %v309
    %1403 = vmatprep.subr.mxu0 %v314
    %1404 = vmatpush1.msra.mxu0 %v313
    %1405 = vmatprep.subr.mxu0 %v318
    %1406 = vmatpush1.msra.mxu0 %v317
    %1407 = vmatprep.subr.mxu0 %v322
    %1408 = vmatpush1.msra.mxu0 %v321
    %1409 = vmatprep.subr.mxu0 %v326
    %1410 = vmatpush1.msra.mxu0 %v325
    %1411 = vmatprep.subr.mxu0 %v330
    %1412 = vmatpush1.msra.mxu0 %v329
    %1413 = vmatprep.subr.mxu0 %v334
    %1414 = vmatpush1.msra.mxu0 %v333
    %1415 = vmatprep.subr.mxu0 %v338
    %1416 = vmatpush1.msra.mxu0 %v337
    %1417 = vmatprep.subr.mxu0 %v342
    %1418 = vmatpush1.msra.mxu0 %v341
    %1419 = vmatprep.subr.mxu0 %v346
    %1420 = vmatpush1.msra.mxu0 %v345
    %1421 = vmatprep.subr.mxu0 %v350
    %1422 = vmatpush1.msra.mxu0 %v349
    %1423 = vmatprep.subr.mxu0 %v354
    %1424 = vmatpush1.msra.mxu0 %v353
    %1425 = vmatprep.subr.mxu0 %v358
    %1426 = vmatpush1.msra.mxu0 %v357
    %1427 = vmatprep.subr.mxu0 %v362
    %1428 = vmatpush1.msra.mxu0 %v361
    %1429 = vmatprep.subr.mxu0 %v366
    %1430 = vmatpush1.msra.mxu0 %v365
    %1431 = vmatprep.subr.mxu0 %v370
    %1432 = vmatpush1.msra.mxu0 %v369
    %1433 = vmatprep.subr.mxu0 %v374
    %1434 = vmatpush1.msra.mxu0 %v373
    %1435 = vmatprep.subr.mxu0 %v378
    %1436 = vmatpush1.msra.mxu0 %v377
    %1437 = vmatprep.subr.mxu0 %v382
    %1438 = vmatpush1.msra.mxu0 %v381
    %1439 = vmatprep.subr.mxu0 %v386
    %1440 = vmatpush1.msra.mxu0 %v385
    %1441 = vmatprep.subr.mxu0 %v390
    %1442 = vmatpush1.msra.mxu0 %v389
    %1443 = vmatprep.subr.mxu0 %v394
    %1444 = vmatpush1.msra.mxu0 %v393
    %1445 = vmatprep.subr.mxu0 %v398
    %1446 = vmatpush1.msra.mxu0 %v397
    %1447 = vmatprep.subr.mxu0 %v402
    %1448 = vmatpush1.msra.mxu0 %v401
    %1449 = vmatprep.subr.mxu0 %v406
    %1450 = vmatpush1.msra.mxu0 %v405
    %1451 = vmatprep.subr.mxu0 %v410
    %1452 = vmatpush1.msra.mxu0 %v409
    %1453 = vmatprep.subr.mxu0 %v414
    %1454 = vmatpush1.msra.mxu0 %v413
    %1455 = vmatprep.subr.mxu0 %v418
    %1456 = vmatpush1.msra.mxu0 %v417
    %1457 = vmatprep.subr.mxu0 %v422
    %1458 = vmatpush1.msra.mxu0 %v421
    %1459 = vmatprep.mubr.f32.mxu0 %v1323
    %1460 = vmatmul.mubr.f32.gmra.mrb[0].mxu0 %v1322
    %v1461 = vpop.f32.mrb[0].mxu0
    %v1462 = vadd.f32 %v1391, %v1461
    %v1463 = vpop.f32.mrb[0].mxu0
    %v1464 = vadd.f32 %v1393, %v1463
    %1465 = vdwg.mxu0
    %1466 = vmatprep.subr.mxu0 %v172
    %1467 = vmatpush1.msra.mxu0 %v171
    %1468 = vmatprep.subr.mxu0 %v176
    %1469 = vmatpush1.msra.mxu0 %v175
    %1470 = vmatprep.subr.mxu0 %v180
    %1471 = vmatpush1.msra.mxu0 %v179
    %1472 = vmatprep.subr.mxu0 %v184
    %1473 = vmatpush1.msra.mxu0 %v183
    %1474 = vmatprep.subr.mxu0 %v188
    %1475 = vmatpush1.msra.mxu0 %v187
    %1476 = vmatprep.subr.mxu0 %v192
    %1477 = vmatpush1.msra.mxu0 %v191
    %1478 = vmatprep.subr.mxu0 %v196
    %1479 = vmatpush1.msra.mxu0 %v195
    %1480 = vmatprep.subr.mxu0 %v200
    %1481 = vmatpush1.msra.mxu0 %v199
    %1482 = vmatprep.subr.mxu0 %v204
    %1483 = vmatpush1.msra.mxu0 %v203
    %1484 = vmatprep.subr.mxu0 %v208
    %1485 = vmatpush1.msra.mxu0 %v207
    %1486 = vmatprep.subr.mxu0 %v212
    %1487 = vmatpush1.msra.mxu0 %v211
    %1488 = vmatprep.subr.mxu0 %v216
    %1489 = vmatpush1.msra.mxu0 %v215
    %1490 = vmatprep.subr.mxu0 %v220
    %1491 = vmatpush1.msra.mxu0 %v219
    %1492 = vmatprep.subr.mxu0 %v224
    %1493 = vmatpush1.msra.mxu0 %v223
    %1494 = vmatprep.subr.mxu0 %v228
    %1495 = vmatpush1.msra.mxu0 %v227
    %1496 = vmatprep.subr.mxu0 %v232
    %1497 = vmatpush1.msra.mxu0 %v231
    %1498 = vmatprep.subr.mxu0 %v236
    %1499 = vmatpush1.msra.mxu0 %v235
    %1500 = vmatprep.subr.mxu0 %v240
    %1501 = vmatpush1.msra.mxu0 %v239
    %1502 = vmatprep.subr.mxu0 %v244
    %1503 = vmatpush1.msra.mxu0 %v243
    %1504 = vmatprep.subr.mxu0 %v248
    %1505 = vmatpush1.msra.mxu0 %v247
    %1506 = vmatprep.subr.mxu0 %v252
    %1507 = vmatpush1.msra.mxu0 %v251
    %1508 = vmatprep.subr.mxu0 %v256
    %1509 = vmatpush1.msra.mxu0 %v255
    %1510 = vmatprep.subr.mxu0 %v260
    %1511 = vmatpush1.msra.mxu0 %v259
    %1512 = vmatprep.subr.mxu0 %v264
    %1513 = vmatpush1.msra.mxu0 %v263
    %1514 = vmatprep.subr.mxu0 %v268
    %1515 = vmatpush1.msra.mxu0 %v267
    %1516 = vmatprep.subr.mxu0 %v272
    %1517 = vmatpush1.msra.mxu0 %v271
    %1518 = vmatprep.subr.mxu0 %v276
    %1519 = vmatpush1.msra.mxu0 %v275
    %1520 = vmatprep.subr.mxu0 %v280
    %1521 = vmatpush1.msra.mxu0 %v279
    %1522 = vmatprep.subr.mxu0 %v284
    %1523 = vmatpush1.msra.mxu0 %v283
    %1524 = vmatprep.subr.mxu0 %v288
    %1525 = vmatpush1.msra.mxu0 %v287
    %1526 = vmatprep.subr.mxu0 %v292
    %1527 = vmatpush1.msra.mxu0 %v291
    %1528 = vmatprep.subr.mxu0 %v296
    %1529 = vmatpush1.msra.mxu0 %v295
    %1530 = vmatprep.mubr.f32.mxu0 %v1321
    %1531 = vmatmul.mubr.f32.gmra.mrb[0].mxu0 %v1320
    %v1532 = vpop.f32.mrb[0].mxu0
    %v1533 = vadd.f32 %v570, %v1532
    %v1534 = vpop.f32.mrb[0].mxu0
    %v1535 = vadd.f32 %v574, %v1534
    %1536 = vdwg.mxu0
    %1537 = vmatprep.subr.mxu0 %v300
    %1538 = vmatpush1.msra.mxu0 %v299
    %1539 = vmatprep.subr.mxu0 %v304
    %1540 = vmatpush1.msra.mxu0 %v303
    %1541 = vmatprep.subr.mxu0 %v308
    %1542 = vmatpush1.msra.mxu0 %v307
    %1543 = vmatprep.subr.mxu0 %v312
    %1544 = vmatpush1.msra.mxu0 %v311
    %1545 = vmatprep.subr.mxu0 %v316
    %1546 = vmatpush1.msra.mxu0 %v315
    %1547 = vmatprep.subr.mxu0 %v320
    %1548 = vmatpush1.msra.mxu0 %v319
    %1549 = vmatprep.subr.mxu0 %v324
    %1550 = vmatpush1.msra.mxu0 %v323
    %1551 = vmatprep.subr.mxu0 %v328
    %1552 = vmatpush1.msra.mxu0 %v327
    %1553 = vmatprep.subr.mxu0 %v332
    %1554 = vmatpush1.msra.mxu0 %v331
    %1555 = vmatprep.subr.mxu0 %v336
    %1556 = vmatpush1.msra.mxu0 %v335
    %1557 = vmatprep.subr.mxu0 %v340
    %1558 = vmatpush1.msra.mxu0 %v339
    %1559 = vmatprep.subr.mxu0 %v344
    %1560 = vmatpush1.msra.mxu0 %v343
    %1561 = vmatprep.subr.mxu0 %v348
    %1562 = vmatpush1.msra.mxu0 %v347
    %1563 = vmatprep.subr.mxu0 %v352
    %1564 = vmatpush1.msra.mxu0 %v351
    %1565 = vmatprep.subr.mxu0 %v356
    %1566 = vmatpush1.msra.mxu0 %v355
    %1567 = vmatprep.subr.mxu0 %v360
    %1568 = vmatpush1.msra.mxu0 %v359
    %1569 = vmatprep.subr.mxu0 %v364
    %1570 = vmatpush1.msra.mxu0 %v363
    %1571 = vmatprep.subr.mxu0 %v368
    %1572 = vmatpush1.msra.mxu0 %v367
    %1573 = vmatprep.subr.mxu0 %v372
    %1574 = vmatpush1.msra.mxu0 %v371
    %1575 = vmatprep.subr.mxu0 %v376
    %1576 = vmatpush1.msra.mxu0 %v375
    %1577 = vmatprep.subr.mxu0 %v380
    %1578 = vmatpush1.msra.mxu0 %v379
    %1579 = vmatprep.subr.mxu0 %v384
    %1580 = vmatpush1.msra.mxu0 %v383
    %1581 = vmatprep.subr.mxu0 %v388
    %1582 = vmatpush1.msra.mxu0 %v387
    %1583 = vmatprep.subr.mxu0 %v392
    %1584 = vmatpush1.msra.mxu0 %v391
    %1585 = vmatprep.subr.mxu0 %v396
    %1586 = vmatpush1.msra.mxu0 %v395
    %1587 = vmatprep.subr.mxu0 %v400
    %1588 = vmatpush1.msra.mxu0 %v399
    %1589 = vmatprep.subr.mxu0 %v404
    %1590 = vmatpush1.msra.mxu0 %v403
    %1591 = vmatprep.subr.mxu0 %v408
    %1592 = vmatpush1.msra.mxu0 %v407
    %1593 = vmatprep.subr.mxu0 %v412
    %1594 = vmatpush1.msra.mxu0 %v411
    %1595 = vmatprep.subr.mxu0 %v416
    %1596 = vmatpush1.msra.mxu0 %v415
    %1597 = vmatprep.subr.mxu0 %v420
    %1598 = vmatpush1.msra.mxu0 %v419
    %1599 = vmatprep.subr.mxu0 %v424
    %1600 = vmatpush1.msra.mxu0 %v423
    %1601 = vmatprep.mubr.f32.mxu0 %v1323
    %1602 = vmatmul.mubr.f32.gmra.mrb[0].mxu0 %v1322
    %v1603 = vpop.f32.mrb[0].mxu0
    %v1604 = vadd.f32 %v1533, %v1603
    %v1605 = vpop.f32.mrb[0].mxu0
    %v1606 = vadd.f32 %v1535, %v1605
    %1607 = vdwg.mxu0
    %v1608 = vrot.slane %v1462, 4
    %v1609 = vadd.f32 %v1462, %v1608
    %v1610 = vrot.slane %v1609, 2
    %v1611 = vadd.f32 %v1609, %v1610
    %v1612 = vrot.slane %v1611, 1
    %v1613 = vadd.f32 %v1611, %v1612
    %v1614 = vrot.slane %v1464, 4
    %v1615 = vadd.f32 %v1464, %v1614
    %v1616 = vrot.slane %v1615, 2
    %v1617 = vadd.f32 %v1615, %v1616
    %v1618 = vrot.slane %v1617, 1
    %v1619 = vadd.f32 %v1617, %v1618
    %v1620 = vrot.slane %v1604, 4
    %v1621 = vadd.f32 %v1604, %v1620
    %v1622 = vrot.slane %v1621, 2
    %v1623 = vadd.f32 %v1621, %v1622
    %v1624 = vrot.slane %v1623, 1
    %v1625 = vadd.f32 %v1623, %v1624
    %v1626 = vrot.slane %v1606, 4
    %v1627 = vadd.f32 %v1606, %v1626
    %v1628 = vrot.slane %v1627, 2
    %v1629 = vadd.f32 %v1627, %v1628
    %v1630 = vrot.slane %v1629, 1
    %v1631 = vadd.f32 %v1629, %v1630
    %v1632 = vmul.f32 %v1613, 0.125
    %v1633 = vmul.f32 %v1619, 0.125
    %v1634 = vmul.f32 %v1625, 0.125
    %v1635 = vmul.f32 %v1631, 0.125
    %v1636 = vmul.f32 %v1462, %v1462
    %v1637 = vmul.f32 %v1464, %v1464
    %v1638 = vmul.f32 %v1604, %v1604
    %v1639 = vmul.f32 %v1606, %v1606
    %v1640 = vrot.slane %v1636, 4
    %v1641 = vadd.f32 %v1636, %v1640
    %v1642 = vrot.slane %v1641, 2
    %v1643 = vadd.f32 %v1641, %v1642
    %v1644 = vrot.slane %v1643, 1
    %v1645 = vadd.f32 %v1643, %v1644
    %v1646 = vrot.slane %v1637, 4
    %v1647 = vadd.f32 %v1637, %v1646
    %v1648 = vrot.slane %v1647, 2
    %v1649 = vadd.f32 %v1647, %v1648
    %v1650 = vrot.slane %v1649, 1
    %v1651 = vadd.f32 %v1649, %v1650
    %v1652 = vrot.slane %v1638, 4
    %v1653 = vadd.f32 %v1638, %v1652
    %v1654 = vrot.slane %v1653, 2
    %v1655 = vadd.f32 %v1653, %v1654
    %v1656 = vrot.slane %v1655, 1
    %v1657 = vadd.f32 %v1655, %v1656
    %v1658 = vrot.slane %v1639, 4
    %v1659 = vadd.f32 %v1639, %v1658
    %v1660 = vrot.slane %v1659, 2
    %v1661 = vadd.f32 %v1659, %v1660
    %v1662 = vrot.slane %v1661, 1
    %v1663 = vadd.f32 %v1661, %v1662
    %v1664 = vmul.f32 %v1645, 0.125
    %v1665 = vmul.f32 %v1651, 0.125
    %v1666 = vmul.f32 %v1657, 0.125
    %v1667 = vmul.f32 %v1663, 0.125
    %v1668 = vmul.f32 %v1632, %v1632
    %v1669 = vmul.f32 %v1633, %v1633
    %v1670 = vmul.f32 %v1634, %v1634
    %v1671 = vmul.f32 %v1635, %v1635
    %v1672 = vsub.f32 %v1664, %v1668
    %v1673 = vsub.f32 %v1665, %v1669
    %v1674 = vsub.f32 %v1666, %v1670
    %v1675 = vsub.f32 %v1667, %v1671
    %v1676 = vsub.f32 %v1462, %v1632
    %v1677 = vsub.f32 %v1464, %v1633
    %v1678 = vsub.f32 %v1604, %v1634
    %v1679 = vsub.f32 %v1606, %v1635
    %v1680 = vadd.f32 %v1672, 1e-05
    %v1681 = vadd.f32 %v1673, 1e-05
    %v1682 = vadd.f32 %v1674, 1e-05
    %v1683 = vadd.f32 %v1675, 1e-05
    %v1684 = vrsqrt.pop %v1680
    %v1685 = vrsqrt.pop %v1681
    %v1686 = vrsqrt.pop %v1682
    %v1687 = vrsqrt.pop %v1683
    %v1688 = vmul.f32 %v1676, %v1684
    %v1689 = vmul.f32 %v1677, %v1685
    %v1690 = vmul.f32 %v1678, %v1686
    %v1691 = vmul.f32 %v1679, %v1687
    %v1692 = vmul.f32 %v1688, %v951
    %v1693 = vmul.f32 %v1689, %v955
    %v1694 = vmul.f32 %v1690, %v959
    %v1695 = vmul.f32 %v1691, %v963
    %v1696 = vadd.f32 %v1692, %v976
    %v1697 = vadd.f32 %v1693, %v980
    %v1698 = vadd.f32 %v1694, %v984
    %v1699 = vadd.f32 %v1695, %v988
    %vm1700 = vcmp.ge.f32.partialorder %v1696, 0.0
    %vm1701 = vcmp.ge.f32.partialorder %v1697, 0.0
    %vm1702 = vcmp.ge.f32.partialorder %v1698, 0.0
    %vm1703 = vcmp.ge.f32.partialorder %v1699, 0.0
    %v1704 = vmul.f32 %v1008, %v1696
    %v1705 = vmul.f32 %v1008, %v1697
    %v1706 = vmul.f32 %v1008, %v1698
    %v1707 = vmul.f32 %v1008, %v1699
    %v1708 = vsel %vm1700, %v1696, %v1704
    %v1709 = vsel %vm1701, %v1697, %v1705
    %v1710 = vsel %vm1702, %v1698, %v1706
    %v1711 = vsel %vm1703, %v1699, %v1707
    %1712 = vmatprep.subr.mxu0 0.0
    %1713 = vmatpush1.msra.mxu0 %v493
    %1714 = vmatprep.subr.mxu0 0.0
    %1715 = vmatpush1.msra.mxu0 %v494
    %1716 = vmatprep.subr.mxu0 0.0
    %1717 = vmatpush1.msra.mxu0 %v495
    %1718 = vmatprep.subr.mxu0 0.0
    %1719 = vmatpush1.msra.mxu0 %v496
    %1720 = vmatprep.subr.mxu0 0.0
    %1721 = vmatpush1.msra.mxu0 %v497
    %1722 = vmatprep.subr.mxu0 0.0
    %1723 = vmatpush1.msra.mxu0 %v498
    %1724 = vmatprep.subr.mxu0 0.0
    %1725 = vmatpush1.msra.mxu0 %v499
    %1726 = vmatprep.subr.mxu0 0.0
    %1727 = vmatpush1.msra.mxu0 %v500
    %1728 = vmatprep.subr.mxu0 0.0
    %1729 = vmatpush1.msra.mxu0 %v501
    %1730 = vmatprep.subr.mxu0 0.0
    %1731 = vmatpush1.msra.mxu0 %v502
    %1732 = vmatprep.subr.mxu0 0.0
    %1733 = vmatpush1.msra.mxu0 %v503
    %1734 = vmatprep.subr.mxu0 0.0
    %1735 = vmatpush1.msra.mxu0 %v504
    %1736 = vmatprep.subr.mxu0 0.0
    %1737 = vmatpush1.msra.mxu0 %v505
    %1738 = vmatprep.subr.mxu0 0.0
    %1739 = vmatpush1.msra.mxu0 %v506
    %1740 = vmatprep.subr.mxu0 0.0
    %1741 = vmatpush1.msra.mxu0 %v507
    %1742 = vmatprep.subr.mxu0 0.0
    %1743 = vmatpush1.msra.mxu0 %v508
    %1744 = vmatprep.subr.mxu0 0.0
    %1745 = vmatpush1.msra.mxu0 %v509
    %1746 = vmatprep.subr.mxu0 0.0
    %1747 = vmatpush1.msra.mxu0 %v510
    %1748 = vmatprep.subr.mxu0 0.0
    %1749 = vmatpush1.msra.mxu0 %v511
    %1750 = vmatprep.subr.mxu0 0.0
    %1751 = vmatpush1.msra.mxu0 %v512
    %1752 = vmatprep.subr.mxu0 0.0
    %1753 = vmatpush1.msra.mxu0 %v513
    %1754 = vmatprep.subr.mxu0 0.0
    %1755 = vmatpush1.msra.mxu0 %v514
    %1756 = vmatprep.subr.mxu0 0.0
    %1757 = vmatpush1.msra.mxu0 %v515
    %1758 = vmatprep.subr.mxu0 0.0
    %1759 = vmatpush1.msra.mxu0 %v516
    %1760 = vmatprep.subr.mxu0 0.0
    %1761 = vmatpush1.msra.mxu0 %v517
    %1762 = vmatprep.subr.mxu0 0.0
    %1763 = vmatpush1.msra.mxu0 %v518
    %1764 = vmatprep.subr.mxu0 0.0
    %1765 = vmatpush1.msra.mxu0 %v519
    %1766 = vmatprep.subr.mxu0 0.0
    %1767 = vmatpush1.msra.mxu0 %v520
    %1768 = vmatprep.subr.mxu0 0.0
    %1769 = vmatpush1.msra.mxu0 %v521
    %1770 = vmatprep.subr.mxu0 0.0
    %1771 = vmatpush1.msra.mxu0 %v522
    %1772 = vmatprep.subr.mxu0 0.0
    %1773 = vmatpush1.msra.mxu0 %v523
    %1774 = vmatprep.subr.mxu0 0.0
    %1775 = vmatpush1.msra.mxu0 %v524
    %1776 = vmatprep.mubr.f32.mxu0 %v1709
    %1777 = vmatmul.mubr.f32.gmra.mrb[0].mxu0 %v1708
    %v1778 = vpop.f32.mrb[0].mxu0
    %v1779 = vadd.f32 0.0, %v1778
    %v1780 = vpop.f32.mrb[0].mxu0
    %1781 = vdwg.mxu0
    %1782 = vmatprep.subr.mxu0 0.0
    %1783 = vmatpush1.msra.mxu0 %v525
    %1784 = vmatprep.subr.mxu0 0.0
    %1785 = vmatpush1.msra.mxu0 %v526
    %1786 = vmatprep.subr.mxu0 0.0
    %1787 = vmatpush1.msra.mxu0 %v527
    %1788 = vmatprep.subr.mxu0 0.0
    %1789 = vmatpush1.msra.mxu0 %v528
    %1790 = vmatprep.subr.mxu0 0.0
    %1791 = vmatpush1.msra.mxu0 %v529
    %1792 = vmatprep.subr.mxu0 0.0
    %1793 = vmatpush1.msra.mxu0 %v530
    %1794 = vmatprep.subr.mxu0 0.0
    %1795 = vmatpush1.msra.mxu0 %v531
    %1796 = vmatprep.subr.mxu0 0.0
    %1797 = vmatpush1.msra.mxu0 %v532
    %1798 = vmatprep.subr.mxu0 0.0
    %1799 = vmatpush1.msra.mxu0 %v533
    %1800 = vmatprep.subr.mxu0 0.0
    %1801 = vmatpush1.msra.mxu0 %v534
    %1802 = vmatprep.subr.mxu0 0.0
    %1803 = vmatpush1.msra.mxu0 %v535
    %1804 = vmatprep.subr.mxu0 0.0
    %1805 = vmatpush1.msra.mxu0 %v536
    %1806 = vmatprep.subr.mxu0 0.0
    %1807 = vmatpush1.msra.mxu0 %v537
    %1808 = vmatprep.subr.mxu0 0.0
    %1809 = vmatpush1.msra.mxu0 %v538
    %1810 = vmatprep.subr.mxu0 0.0
    %1811 = vmatpush1.msra.mxu0 %v539
    %1812 = vmatprep.subr.mxu0 0.0
    %1813 = vmatpush1.msra.mxu0 %v540
    %1814 = vmatprep.subr.mxu0 0.0
    %1815 = vmatpush1.msra.mxu0 %v541
    %1816 = vmatprep.subr.mxu0 0.0
    %1817 = vmatpush1.msra.mxu0 %v542
    %1818 = vmatprep.subr.mxu0 0.0
    %1819 = vmatpush1.msra.mxu0 %v543
    %1820 = vmatprep.subr.mxu0 0.0
    %1821 = vmatpush1.msra.mxu0 %v544
    %1822 = vmatprep.subr.mxu0 0.0
    %1823 = vmatpush1.msra.mxu0 %v545
    %1824 = vmatprep.subr.mxu0 0.0
    %1825 = vmatpush1.msra.mxu0 %v546
    %1826 = vmatprep.subr.mxu0 0.0
    %1827 = vmatpush1.msra.mxu0 %v547
    %1828 = vmatprep.subr.mxu0 0.0
    %1829 = vmatpush1.msra.mxu0 %v548
    %1830 = vmatprep.subr.mxu0 0.0
    %1831 = vmatpush1.msra.mxu0 %v549
    %1832 = vmatprep.subr.mxu0 0.0
    %1833 = vmatpush1.msra.mxu0 %v550
    %1834 = vmatprep.subr.mxu0 0.0
    %1835 = vmatpush1.msra.mxu0 %v551
    %1836 = vmatprep.subr.mxu0 0.0
    %1837 = vmatpush1.msra.mxu0 %v552
    %1838 = vmatprep.subr.mxu0 0.0
    %1839 = vmatpush1.msra.mxu0 %v553
    %1840 = vmatprep.subr.mxu0 0.0
    %1841 = vmatpush1.msra.mxu0 %v554
    %1842 = vmatprep.subr.mxu0 0.0
    %1843 = vmatpush1.msra.mxu0 %v555
    %1844 = vmatprep.subr.mxu0 0.0
    %1845 = vmatpush1.msra.mxu0 %v556
    %1846 = vmatprep.mubr.f32.mxu0 %v1711
    %1847 = vmatmul.mubr.f32.gmra.mrb[0].mxu0 %v1710
    %v1848 = vpop.f32.mrb[0].mxu0
    %v1849 = vadd.f32 %v1779, %v1848
    %v1850 = vpop.f32.mrb[0].mxu0
    %1851 = vdwg.mxu0
    %1852 = vmatprep.subr.mxu0 0.0
    %1853 = vmatpush1.msra.mxu0 %v429
    %1854 = vmatprep.subr.mxu0 0.0
    %1855 = vmatpush1.msra.mxu0 %v430
    %1856 = vmatprep.subr.mxu0 0.0
    %1857 = vmatpush1.msra.mxu0 %v431
    %1858 = vmatprep.subr.mxu0 0.0
    %1859 = vmatpush1.msra.mxu0 %v432
    %1860 = vmatprep.subr.mxu0 0.0
    %1861 = vmatpush1.msra.mxu0 %v433
    %1862 = vmatprep.subr.mxu0 0.0
    %1863 = vmatpush1.msra.mxu0 %v434
    %1864 = vmatprep.subr.mxu0 0.0
    %1865 = vmatpush1.msra.mxu0 %v435
    %1866 = vmatprep.subr.mxu0 0.0
    %1867 = vmatpush1.msra.mxu0 %v436
    %1868 = vmatprep.subr.mxu0 0.0
    %1869 = vmatpush1.msra.mxu0 %v437
    %1870 = vmatprep.subr.mxu0 0.0
    %1871 = vmatpush1.msra.mxu0 %v438
    %1872 = vmatprep.subr.mxu0 0.0
    %1873 = vmatpush1.msra.mxu0 %v439
    %1874 = vmatprep.subr.mxu0 0.0
    %1875 = vmatpush1.msra.mxu0 %v440
    %1876 = vmatprep.subr.mxu0 0.0
    %1877 = vmatpush1.msra.mxu0 %v441
    %1878 = vmatprep.subr.mxu0 0.0
    %1879 = vmatpush1.msra.mxu0 %v442
    %1880 = vmatprep.subr.mxu0 0.0
    %1881 = vmatpush1.msra.mxu0 %v443
    %1882 = vmatprep.subr.mxu0 0.0
    %1883 = vmatpush1.msra.mxu0 %v444
    %1884 = vmatprep.subr.mxu0 0.0
    %1885 = vmatpush1.msra.mxu0 %v445
    %1886 = vmatprep.subr.mxu0 0.0
    %1887 = vmatpush1.msra.mxu0 %v446
    %1888 = vmatprep.subr.mxu0 0.0
    %1889 = vmatpush1.msra.mxu0 %v447
    %1890 = vmatprep.subr.mxu0 0.0
    %1891 = vmatpush1.msra.mxu0 %v448
    %1892 = vmatprep.subr.mxu0 0.0
    %1893 = vmatpush1.msra.mxu0 %v449
    %1894 = vmatprep.subr.mxu0 0.0
    %1895 = vmatpush1.msra.mxu0 %v450
    %1896 = vmatprep.subr.mxu0 0.0
    %1897 = vmatpush1.msra.mxu0 %v451
    %1898 = vmatprep.subr.mxu0 0.0
    %1899 = vmatpush1.msra.mxu0 %v452
    %1900 = vmatprep.subr.mxu0 0.0
    %1901 = vmatpush1.msra.mxu0 %v453
    %1902 = vmatprep.subr.mxu0 0.0
    %1903 = vmatpush1.msra.mxu0 %v454
    %1904 = vmatprep.subr.mxu0 0.0
    %1905 = vmatpush1.msra.mxu0 %v455
    %1906 = vmatprep.subr.mxu0 0.0
    %1907 = vmatpush1.msra.mxu0 %v456
    %1908 = vmatprep.subr.mxu0 0.0
    %1909 = vmatpush1.msra.mxu0 %v457
    %1910 = vmatprep.subr.mxu0 0.0
    %1911 = vmatpush1.msra.mxu0 %v458
    %1912 = vmatprep.subr.mxu0 0.0
    %1913 = vmatpush1.msra.mxu0 %v459
    %1914 = vmatprep.subr.mxu0 0.0
    %1915 = vmatpush1.msra.mxu0 %v460
    %1916 = vmatprep.mubr.f32.mxu0 %v1321
    %1917 = vmatmul.mubr.f32.gmra.mrb[0].mxu0 %v1320
    %v1918 = vpop.f32.mrb[0].mxu0
    %v1919 = vadd.f32 %v1849, %v1918
    %v1920 = vpop.f32.mrb[0].mxu0
    %1921 = vdwg.mxu0
    %1922 = vmatprep.subr.mxu0 0.0
    %1923 = vmatpush1.msra.mxu0 %v461
    %1924 = vmatprep.subr.mxu0 0.0
    %1925 = vmatpush1.msra.mxu0 %v462
    %1926 = vmatprep.subr.mxu0 0.0
    %1927 = vmatpush1.msra.mxu0 %v463
    %1928 = vmatprep.subr.mxu0 0.0
    %1929 = vmatpush1.msra.mxu0 %v464
    %1930 = vmatprep.subr.mxu0 0.0
    %1931 = vmatpush1.msra.mxu0 %v465
    %1932 = vmatprep.subr.mxu0 0.0
    %1933 = vmatpush1.msra.mxu0 %v466
    %1934 = vmatprep.subr.mxu0 0.0
    %1935 = vmatpush1.msra.mxu0 %v467
    %1936 = vmatprep.subr.mxu0 0.0
    %1937 = vmatpush1.msra.mxu0 %v468
    %1938 = vmatprep.subr.mxu0 0.0
    %1939 = vmatpush1.msra.mxu0 %v469
    %1940 = vmatprep.subr.mxu0 0.0
    %1941 = vmatpush1.msra.mxu0 %v470
    %1942 = vmatprep.subr.mxu0 0.0
    %1943 = vmatpush1.msra.mxu0 %v471
    %1944 = vmatprep.subr.mxu0 0.0
    %1945 = vmatpush1.msra.mxu0 %v472
    %1946 = vmatprep.subr.mxu0 0.0
    %1947 = vmatpush1.msra.mxu0 %v473
    %1948 = vmatprep.subr.mxu0 0.0
    %1949 = vmatpush1.msra.mxu0 %v474
    %1950 = vmatprep.subr.mxu0 0.0
    %1951 = vmatpush1.msra.mxu0 %v475
    %1952 = vmatprep.subr.mxu0 0.0
    %1953 = vmatpush1.msra.mxu0 %v476
    %1954 = vmatprep.subr.mxu0 0.0
    %1955 = vmatpush1.msra.mxu0 %v477
    %1956 = vmatprep.subr.mxu0 0.0
    %1957 = vmatpush1.msra.mxu0 %v478
    %1958 = vmatprep.subr.mxu0 0.0
    %1959 = vmatpush1.msra.mxu0 %v479
    %1960 = vmatprep.subr.mxu0 0.0
    %1961 = vmatpush1.msra.mxu0 %v480
    %1962 = vmatprep.subr.mxu0 0.0
    %1963 = vmatpush1.msra.mxu0 %v481
    %1964 = vmatprep.subr.mxu0 0.0
    %1965 = vmatpush1.msra.mxu0 %v482
    %1966 = vmatprep.subr.mxu0 0.0
    %1967 = vmatpush1.msra.mxu0 %v483
    %1968 = vmatprep.subr.mxu0 0.0
    %1969 = vmatpush1.msra.mxu0 %v484
    %1970 = vmatprep.subr.mxu0 0.0
    %1971 = vmatpush1.msra.mxu0 %v485
    %1972 = vmatprep.subr.mxu0 0.0
    %1973 = vmatpush1.msra.mxu0 %v486
    %1974 = vmatprep.subr.mxu0 0.0
    %1975 = vmatpush1.msra.mxu0 %v487
    %1976 = vmatprep.subr.mxu0 0.0
    %1977 = vmatpush1.msra.mxu0 %v488
    %1978 = vmatprep.subr.mxu0 0.0
    %1979 = vmatpush1.msra.mxu0 %v489
    %1980 = vmatprep.subr.mxu0 0.0
    %1981 = vmatpush1.msra.mxu0 %v490
    %1982 = vmatprep.subr.mxu0 0.0
    %1983 = vmatpush1.msra.mxu0 %v491
    %1984 = vmatprep.subr.mxu0 0.0
    %1985 = vmatpush1.msra.mxu0 %v492
    %1986 = vmatprep.mubr.f32.mxu0 %v1323
    %1987 = vmatmul.mubr.f32.gmra.mrb[0].mxu0 %v1322
    %v1988 = vpop.f32.mrb[0].mxu0
    %v1989 = vadd.f32 %v1919, %v1988
    %v1990 = vpop.f32.mrb[0].mxu0
    %1991 = vdwg.mxu0
    %v1992 = vadd.f32 %v1989, %v1302
    %v1993 = vxor.u32 %v1992, 2147483648
    %v1994 = vmul.f32 %v1993, 1.442695
    %v1995 = vpow.pop %v1994
    %v1996 = vadd.f32 %v1995, 1.0
    %v1997 = vrcp.pop %v1996
    %v1998 = vmul.f32 1.0, %v1997
    %2000 = vset.pattern.permute.xlu0 0
    %2001 = vperm.xlu0 %2000, %v1998
    %v2002 = vpop.permute.xlu0 %2001
    %v2004 = vmul.f32 %v1708, %v2002
    %v2005 = vmul.f32 %v1709, %v2002
    %v2006 = vmul.f32 %v1710, %v2002
    %v2007 = vmul.f32 %v1711, %v2002
    %v2008 = vsub.f32 %v1320, %v2004
    %v2009 = vsub.f32 %v1321, %v2005
    %v2010 = vsub.f32 %v1322, %v2006
    %v2011 = vsub.f32 %v1323, %v2007
    %2012 = vmatprep.subr.mxu0 %v170
    %2013 = vmatpush1.msra.mxu0 %v169
    %2014 = vmatprep.subr.mxu0 %v174
    %2015 = vmatpush1.msra.mxu0 %v173
    %2016 = vmatprep.subr.mxu0 %v178
    %2017 = vmatpush1.msra.mxu0 %v177
    %2018 = vmatprep.subr.mxu0 %v182
    %2019 = vmatpush1.msra.mxu0 %v181
    %2020 = vmatprep.subr.mxu0 %v186
    %2021 = vmatpush1.msra.mxu0 %v185
    %2022 = vmatprep.subr.mxu0 %v190
    %2023 = vmatpush1.msra.mxu0 %v189
    %2024 = vmatprep.subr.mxu0 %v194
    %2025 = vmatpush1.msra.mxu0 %v193
    %2026 = vmatprep.subr.mxu0 %v198
    %2027 = vmatpush1.msra.mxu0 %v197
    %2028 = vmatprep.subr.mxu0 %v202
    %2029 = vmatpush1.msra.mxu0 %v201
    %2030 = vmatprep.subr.mxu0 %v206
    %2031 = vmatpush1.msra.mxu0 %v205
    %2032 = vmatprep.subr.mxu0 %v210
    %2033 = vmatpush1.msra.mxu0 %v209
    %2034 = vmatprep.subr.mxu0 %v214
    %2035 = vmatpush1.msra.mxu0 %v213
    %2036 = vmatprep.subr.mxu0 %v218
    %2037 = vmatpush1.msra.mxu0 %v217
    %2038 = vmatprep.subr.mxu0 %v222
    %2039 = vmatpush1.msra.mxu0 %v221
    %2040 = vmatprep.subr.mxu0 %v226
    %2041 = vmatpush1.msra.mxu0 %v225
    %2042 = vmatprep.subr.mxu0 %v230
    %2043 = vmatpush1.msra.mxu0 %v229
    %2044 = vmatprep.subr.mxu0 %v234
    %2045 = vmatpush1.msra.mxu0 %v233
    %2046 = vmatprep.subr.mxu0 %v238
    %2047 = vmatpush1.msra.mxu0 %v237
    %2048 = vmatprep.subr.mxu0 %v242
    %2049 = vmatpush1.msra.mxu0 %v241
    %2050 = vmatprep.subr.mxu0 %v246
    %2051 = vmatpush1.msra.mxu0 %v245
    %2052 = vmatprep.subr.mxu0 %v250
    %2053 = vmatpush1.msra.mxu0 %v249
    %2054 = vmatprep.subr.mxu0 %v254
    %2055 = vmatpush1.msra.mxu0 %v253
    %2056 = vmatprep.subr.mxu0 %v258
    %2057 = vmatpush1.msra.mxu0 %v257
    %2058 = vmatprep.subr.mxu0 %v262
    %2059 = vmatpush1.msra.mxu0 %v261
    %2060 = vmatprep.subr.mxu0 %v266
    %2061 = vmatpush1.msra.mxu0 %v265
    %2062 = vmatprep.subr.mxu0 %v270
    %2063 = vmatpush1.msra.mxu0 %v269
    %2064 = vmatprep.subr.mxu0 %v274
    %2065 = vmatpush1.msra.mxu0 %v273
    %2066 = vmatprep.subr.mxu0 %v278
    %2067 = vmatpush1.msra.mxu0 %v277
    %2068 = vmatprep.subr.mxu0 %v282
    %2069 = vmatpush1.msra.mxu0 %v281
    %2070 = vmatprep.subr.mxu0 %v286
    %2071 = vmatpush1.msra.mxu0 %v285
    %2072 = vmatprep.subr.mxu0 %v290
    %2073 = vmatpush1.msra.mxu0 %v289
    %2074 = vmatprep.subr.mxu0 %v294
    %2075 = vmatpush1.msra.mxu0 %v293
    %2076 = vmatprep.mubr.f32.mxu0 %v2009
    %2077 = vmatmul.mubr.f32.gmra.mrb[0].mxu0 %v2008
    %v2078 = vpop.f32.mrb[0].mxu0
    %v2079 = vadd.f32 %v562, %v2078
    %v2080 = vpop.f32.mrb[0].mxu0
    %v2081 = vadd.f32 %v566, %v2080
    %2082 = vdwg.mxu0
    %2083 = vmatprep.subr.mxu0 %v298
    %2084 = vmatpush1.msra.mxu0 %v297
    %2085 = vmatprep.subr.mxu0 %v302
    %2086 = vmatpush1.msra.mxu0 %v301
    %2087 = vmatprep.subr.mxu0 %v306
    %2088 = vmatpush1.msra.mxu0 %v305
    %2089 = vmatprep.subr.mxu0 %v310
    %2090 = vmatpush1.msra.mxu0 %v309
    %2091 = vmatprep.subr.mxu0 %v314
    %2092 = vmatpush1.msra.mxu0 %v313
    %2093 = vmatprep.subr.mxu0 %v318
    %2094 = vmatpush1.msra.mxu0 %v317
    %2095 = vmatprep.subr.mxu0 %v322
    %2096 = vmatpush1.msra.mxu0 %v321
    %2097 = vmatprep.subr.mxu0 %v326
    %2098 = vmatpush1.msra.mxu0 %v325
    %2099 = vmatprep.subr.mxu0 %v330
    %2100 = vmatpush1.msra.mxu0 %v329
    %2101 = vmatprep.subr.mxu0 %v334
    %2102 = vmatpush1.msra.mxu0 %v333
    %2103 = vmatprep.subr.mxu0 %v338
    %2104 = vmatpush1.msra.mxu0 %v337
    %2105 = vmatprep.subr.mxu0 %v342
    %2106 = vmatpush1.msra.mxu0 %v341
    %2107 = vmatprep.subr.mxu0 %v346
    %2108 = vmatpush1.msra.mxu0 %v345
    %2109 = vmatprep.subr.mxu0 %v350
    %2110 = vmatpush1.msra.mxu0 %v349
    %2111 = vmatprep.subr.mxu0 %v354
    %2112 = vmatpush1.msra.mxu0 %v353
    %2113 = vmatprep.subr.mxu0 %v358
    %2114 = vmatpush1.msra.mxu0 %v357
    %2115 = vmatprep.subr.mxu0 %v362
    %2116 = vmatpush1.msra.mxu0 %v361
    %2117 = vmatprep.subr.mxu0 %v366
    %2118 = vmatpush1.msra.mxu0 %v365
    %2119 = vmatprep.subr.mxu0 %v370
    %2120 = vmatpush1.msra.mxu0 %v369
    %2121 = vmatprep.subr.mxu0 %v374
    %2122 = vmatpush1.msra.mxu0 %v373
    %2123 = vmatprep.subr.mxu0 %v378
    %2124 = vmatpush1.msra.mxu0 %v377
    %2125 = vmatprep.subr.mxu0 %v382
    %2126 = vmatpush1.msra.mxu0 %v381
    %2127 = vmatprep.subr.mxu0 %v386
    %2128 = vmatpush1.msra.mxu0 %v385
    %2129 = vmatprep.subr.mxu0 %v390
    %2130 = vmatpush1.msra.mxu0 %v389
    %2131 = vmatprep.subr.mxu0 %v394
    %2132 = vmatpush1.msra.mxu0 %v393
    %2133 = vmatprep.subr.mxu0 %v398
    %2134 = vmatpush1.msra.mxu0 %v397
    %2135 = vmatprep.subr.mxu0 %v402
    %2136 = vmatpush1.msra.mxu0 %v401
    %2137 = vmatprep.subr.mxu0 %v406
    %2138 = vmatpush1.msra.mxu0 %v405
    %2139 = vmatprep.subr.mxu0 %v410
    %2140 = vmatpush1.msra.mxu0 %v409
    %2141 = vmatprep.subr.mxu0 %v414
    %2142 = vmatpush1.msra.mxu0 %v413
    %2143 = vmatprep.subr.mxu0 %v418
    %2144 = vmatpush1.msra.mxu0 %v417
    %2145 = vmatprep.subr.mxu0 %v422
    %2146 = vmatpush1.msra.mxu0 %v421
    %2147 = vmatprep.mubr.f32.mxu0 %v2011
    %2148 = vmatmul.mubr.f32.gmra.mrb[0].mxu0 %v2010
    %v2149 = vpop.f32.mrb[0].mxu0
    %v2150 = vadd.f32 %v2079, %v2149
    %v2151 = vpop.f32.mrb[0].mxu0
    %v2152 = vadd.f32 %v2081, %v2151
    %2153 = vdwg.mxu0
    %2154 = vmatprep.subr.mxu0 %v172
    %2155 = vmatpush1.msra.mxu0 %v171
    %2156 = vmatprep.subr.mxu0 %v176
    %2157 = vmatpush1.msra.mxu0 %v175
    %2158 = vmatprep.subr.mxu0 %v180
    %2159 = vmatpush1.msra.mxu0 %v179
    %2160 = vmatprep.subr.mxu0 %v184
    %2161 = vmatpush1.msra.mxu0 %v183
    %2162 = vmatprep.subr.mxu0 %v188
    %2163 = vmatpush1.msra.mxu0 %v187
    %2164 = vmatprep.subr.mxu0 %v192
    %2165 = vmatpush1.msra.mxu0 %v191
    %2166 = vmatprep.subr.mxu0 %v196
    %2167 = vmatpush1.msra.mxu0 %v195
    %2168 = vmatprep.subr.mxu0 %v200
    %2169 = vmatpush1.msra.mxu0 %v199
    %2170 = vmatprep.subr.mxu0 %v204
    %2171 = vmatpush1.msra.mxu0 %v203
    %2172 = vmatprep.subr.mxu0 %v208
    %2173 = vmatpush1.msra.mxu0 %v207
    %2174 = vmatprep.subr.mxu0 %v212
    %2175 = vmatpush1.msra.mxu0 %v211
    %2176 = vmatprep.subr.mxu0 %v216
    %2177 = vmatpush1.msra.mxu0 %v215
    %2178 = vmatprep.subr.mxu0 %v220
    %2179 = vmatpush1.msra.mxu0 %v219
    %2180 = vmatprep.subr.mxu0 %v224
    %2181 = vmatpush1.msra.mxu0 %v223
    %2182 = vmatprep.subr.mxu0 %v228
    %2183 = vmatpush1.msra.mxu0 %v227
    %2184 = vmatprep.subr.mxu0 %v232
    %2185 = vmatpush1.msra.mxu0 %v231
    %2186 = vmatprep.subr.mxu0 %v236
    %2187 = vmatpush1.msra.mxu0 %v235
    %2188 = vmatprep.subr.mxu0 %v240
    %2189 = vmatpush1.msra.mxu0 %v239
    %2190 = vmatprep.subr.mxu0 %v244
    %2191 = vmatpush1.msra.mxu0 %v243
    %2192 = vmatprep.subr.mxu0 %v248
    %2193 = vmatpush1.msra.mxu0 %v247
    %2194 = vmatprep.subr.mxu0 %v252
    %2195 = vmatpush1.msra.mxu0 %v251
    %2196 = vmatprep.subr.mxu0 %v256
    %2197 = vmatpush1.msra.mxu0 %v255
    %2198 = vmatprep.subr.mxu0 %v260
    %2199 = vmatpush1.msra.mxu0 %v259
    %2200 = vmatprep.subr.mxu0 %v264
    %2201 = vmatpush1.msra.mxu0 %v263
    %2202 = vmatprep.subr.mxu0 %v268
    %2203 = vmatpush1.msra.mxu0 %v267
    %2204 = vmatprep.subr.mxu0 %v272
    %2205 = vmatpush1.msra.mxu0 %v271
    %2206 = vmatprep.subr.mxu0 %v276
    %2207 = vmatpush1.msra.mxu0 %v275
    %2208 = vmatprep.subr.mxu0 %v280
    %2209 = vmatpush1.msra.mxu0 %v279
    %2210 = vmatprep.subr.mxu0 %v284
    %2211 = vmatpush1.msra.mxu0 %v283
    %2212 = vmatprep.subr.mxu0 %v288
    %2213 = vmatpush1.msra.mxu0 %v287
    %2214 = vmatprep.subr.mxu0 %v292
    %2215 = vmatpush1.msra.mxu0 %v291
    %2216 = vmatprep.subr.mxu0 %v296
    %2217 = vmatpush1.msra.mxu0 %v295
    %2218 = vmatprep.mubr.f32.mxu0 %v2009
    %2219 = vmatmul.mubr.f32.gmra.mrb[0].mxu0 %v2008
    %v2220 = vpop.f32.mrb[0].mxu0
    %v2221 = vadd.f32 %v570, %v2220
    %v2222 = vpop.f32.mrb[0].mxu0
    %v2223 = vadd.f32 %v574, %v2222
    %2224 = vdwg.mxu0
    %2225 = vmatprep.subr.mxu0 %v300
    %2226 = vmatpush1.msra.mxu0 %v299
    %2227 = vmatprep.subr.mxu0 %v304
    %2228 = vmatpush1.msra.mxu0 %v303
    %2229 = vmatprep.subr.mxu0 %v308
    %2230 = vmatpush1.msra.mxu0 %v307
    %2231 = vmatprep.subr.mxu0 %v312
    %2232 = vmatpush1.msra.mxu0 %v311
    %2233 = vmatprep.subr.mxu0 %v316
    %2234 = vmatpush1.msra.mxu0 %v315
    %2235 = vmatprep.subr.mxu0 %v320
    %2236 = vmatpush1.msra.mxu0 %v319
    %2237 = vmatprep.subr.mxu0 %v324
    %2238 = vmatpush1.msra.mxu0 %v323
    %2239 = vmatprep.subr.mxu0 %v328
    %2240 = vmatpush1.msra.mxu0 %v327
    %2241 = vmatprep.subr.mxu0 %v332
    %2242 = vmatpush1.msra.mxu0 %v331
    %2243 = vmatprep.subr.mxu0 %v336
    %2244 = vmatpush1.msra.mxu0 %v335
    %2245 = vmatprep.subr.mxu0 %v340
    %2246 = vmatpush1.msra.mxu0 %v339
    %2247 = vmatprep.subr.mxu0 %v344
    %2248 = vmatpush1.msra.mxu0 %v343
    %2249 = vmatprep.subr.mxu0 %v348
    %2250 = vmatpush1.msra.mxu0 %v347
    %2251 = vmatprep.subr.mxu0 %v352
    %2252 = vmatpush1.msra.mxu0 %v351
    %2253 = vmatprep.subr.mxu0 %v356
    %2254 = vmatpush1.msra.mxu0 %v355
    %2255 = vmatprep.subr.mxu0 %v360
    %2256 = vmatpush1.msra.mxu0 %v359
    %2257 = vmatprep.subr.mxu0 %v364
    %2258 = vmatpush1.msra.mxu0 %v363
    %2259 = vmatprep.subr.mxu0 %v368
    %2260 = vmatpush1.msra.mxu0 %v367
    %2261 = vmatprep.subr.mxu0 %v372
    %2262 = vmatpush1.msra.mxu0 %v371
    %2263 = vmatprep.subr.mxu0 %v376
    %2264 = vmatpush1.msra.mxu0 %v375
    %2265 = vmatprep.subr.mxu0 %v380
    %2266 = vmatpush1.msra.mxu0 %v379
    %2267 = vmatprep.subr.mxu0 %v384
    %2268 = vmatpush1.msra.mxu0 %v383
    %2269 = vmatprep.subr.mxu0 %v388
    %2270 = vmatpush1.msra.mxu0 %v387
    %2271 = vmatprep.subr.mxu0 %v392
    %2272 = vmatpush1.msra.mxu0 %v391
    %2273 = vmatprep.subr.mxu0 %v396
    %2274 = vmatpush1.msra.mxu0 %v395
    %2275 = vmatprep.subr.mxu0 %v400
    %2276 = vmatpush1.msra.mxu0 %v399
    %2277 = vmatprep.subr.mxu0 %v404
    %2278 = vmatpush1.msra.mxu0 %v403
    %2279 = vmatprep.subr.mxu0 %v408
    %2280 = vmatpush1.msra.mxu0 %v407
    %2281 = vmatprep.subr.mxu0 %v412
    %2282 = vmatpush1.msra.mxu0 %v411
    %2283 = vmatprep.subr.mxu0 %v416
    %2284 = vmatpush1.msra.mxu0 %v415
    %2285 = vmatprep.subr.mxu0 %v420
    %2286 = vmatpush1.msra.mxu0 %v419
    %2287 = vmatprep.subr.mxu0 %v424
    %2288 = vmatpush1.msra.mxu0 %v423
    %2289 = vmatprep.mubr.f32.mxu0 %v2011
    %2290 = vmatmul.mubr.f32.gmra.mrb[0].mxu0 %v2010
    %v2291 = vpop.f32.mrb[0].mxu0
    %v2292 = vadd.f32 %v2221, %v2291
    %v2293 = vpop.f32.mrb[0].mxu0
    %v2294 = vadd.f32 %v2223, %v2293
    %2295 = vdwg.mxu0
    %v2296 = vrot.slane %v2150, 4
    %v2297 = vadd.f32 %v2150, %v2296
    %v2298 = vrot.slane %v2297, 2
    %v2299 = vadd.f32 %v2297, %v2298
    %v2300 = vrot.slane %v2299, 1
    %v2301 = vadd.f32 %v2299, %v2300
    %v2302 = vrot.slane %v2152, 4
    %v2303 = vadd.f32 %v2152, %v2302
    %v2304 = vrot.slane %v2303, 2
    %v2305 = vadd.f32 %v2303, %v2304
    %v2306 = vrot.slane %v2305, 1
    %v2307 = vadd.f32 %v2305, %v2306
    %v2308 = vrot.slane %v2292, 4
    %v2309 = vadd.f32 %v2292, %v2308
    %v2310 = vrot.slane %v2309, 2
    %v2311 = vadd.f32 %v2309, %v2310
    %v2312 = vrot.slane %v2311, 1
    %v2313 = vadd.f32 %v2311, %v2312
    %v2314 = vrot.slane %v2294, 4
    %v2315 = vadd.f32 %v2294, %v2314
    %v2316 = vrot.slane %v2315, 2
    %v2317 = vadd.f32 %v2315, %v2316
    %v2318 = vrot.slane %v2317, 1
    %v2319 = vadd.f32 %v2317, %v2318
    %v2320 = vmul.f32 %v2301, 0.125
    %v2321 = vmul.f32 %v2307, 0.125
    %v2322 = vmul.f32 %v2313, 0.125
    %v2323 = vmul.f32 %v2319, 0.125
    %v2324 = vmul.f32 %v2150, %v2150
    %v2325 = vmul.f32 %v2152, %v2152
    %v2326 = vmul.f32 %v2292, %v2292
    %v2327 = vmul.f32 %v2294, %v2294
    %v2328 = vrot.slane %v2324, 4
    %v2329 = vadd.f32 %v2324, %v2328
    %v2330 = vrot.slane %v2329, 2
    %v2331 = vadd.f32 %v2329, %v2330
    %v2332 = vrot.slane %v2331, 1
    %v2333 = vadd.f32 %v2331, %v2332
    %v2334 = vrot.slane %v2325, 4
    %v2335 = vadd.f32 %v2325, %v2334
    %v2336 = vrot.slane %v2335, 2
    %v2337 = vadd.f32 %v2335, %v2336
    %v2338 = vrot.slane %v2337, 1
    %v2339 = vadd.f32 %v2337, %v2338
    %v2340 = vrot.slane %v2326, 4
    %v2341 = vadd.f32 %v2326, %v2340
    %v2342 = vrot.slane %v2341, 2
    %v2343 = vadd.f32 %v2341, %v2342
    %v2344 = vrot.slane %v2343, 1
    %v2345 = vadd.f32 %v2343, %v2344
    %v2346 = vrot.slane %v2327, 4
    %v2347 = vadd.f32 %v2327, %v2346
    %v2348 = vrot.slane %v2347, 2
    %v2349 = vadd.f32 %v2347, %v2348
    %v2350 = vrot.slane %v2349, 1
    %v2351 = vadd.f32 %v2349, %v2350
    %v2352 = vmul.f32 %v2333, 0.125
    %v2353 = vmul.f32 %v2339, 0.125
    %v2354 = vmul.f32 %v2345, 0.125
    %v2355 = vmul.f32 %v2351, 0.125
    %v2356 = vmul.f32 %v2320, %v2320
    %v2357 = vmul.f32 %v2321, %v2321
    %v2358 = vmul.f32 %v2322, %v2322
    %v2359 = vmul.f32 %v2323, %v2323
    %v2360 = vsub.f32 %v2352, %v2356
    %v2361 = vsub.f32 %v2353, %v2357
    %v2362 = vsub.f32 %v2354, %v2358
    %v2363 = vsub.f32 %v2355, %v2359
    %v2364 = vsub.f32 %v2150, %v2320
    %v2365 = vsub.f32 %v2152, %v2321
    %v2366 = vsub.f32 %v2292, %v2322
    %v2367 = vsub.f32 %v2294, %v2323
    %v2368 = vadd.f32 %v2360, 1e-05
    %v2369 = vadd.f32 %v2361, 1e-05
    %v2370 = vadd.f32 %v2362, 1e-05
    %v2371 = vadd.f32 %v2363, 1e-05
    %v2372 = vrsqrt.pop %v2368
    %v2373 = vrsqrt.pop %v2369
    %v2374 = vrsqrt.pop %v2370
    %v2375 = vrsqrt.pop %v2371
    %v2376 = vmul.f32 %v2364, %v2372
    %v2377 = vmul.f32 %v2365, %v2373
    %v2378 = vmul.f32 %v2366, %v2374
    %v2379 = vmul.f32 %v2367, %v2375
    %v2380 = vmul.f32 %v2376, %v951
    %v2381 = vmul.f32 %v2377, %v955
    %v2382 = vmul.f32 %v2378, %v959
    %v2383 = vmul.f32 %v2379, %v963
    %v2384 = vadd.f32 %v2380, %v976
    %v2385 = vadd.f32 %v2381, %v980
    %v2386 = vadd.f32 %v2382, %v984
    %v2387 = vadd.f32 %v2383, %v988
    %vm2388 = vcmp.ge.f32.partialorder %v2384, 0.0
    %vm2389 = vcmp.ge.f32.partialorder %v2385, 0.0
    %vm2390 = vcmp.ge.f32.partialorder %v2386, 0.0
    %vm2391 = vcmp.ge.f32.partialorder %v2387, 0.0
    %v2392 = vmul.f32 %v1008, %v2384
    %v2393 = vmul.f32 %v1008, %v2385
    %v2394 = vmul.f32 %v1008, %v2386
    %v2395 = vmul.f32 %v1008, %v2387
    %v2396 = vsel %vm2388, %v2384, %v2392
    %v2397 = vsel %vm2389, %v2385, %v2393
    %v2398 = vsel %vm2390, %v2386, %v2394
    %v2399 = vsel %vm2391, %v2387, %v2395
    %2400 = vmatprep.subr.mxu0 0.0
    %2401 = vmatpush1.msra.mxu0 %v493
    %2402 = vmatprep.subr.mxu0 0.0
    %2403 = vmatpush1.msra.mxu0 %v494
    %2404 = vmatprep.subr.mxu0 0.0
    %2405 = vmatpush1.msra.mxu0 %v495
    %2406 = vmatprep.subr.mxu0 0.0
    %2407 = vmatpush1.msra.mxu0 %v496
    %2408 = vmatprep.subr.mxu0 0.0
    %2409 = vmatpush1.msra.mxu0 %v497
    %2410 = vmatprep.subr.mxu0 0.0
    %2411 = vmatpush1.msra.mxu0 %v498
    %2412 = vmatprep.subr.mxu0 0.0
    %2413 = vmatpush1.msra.mxu0 %v499
    %2414 = vmatprep.subr.mxu0 0.0
    %2415 = vmatpush1.msra.mxu0 %v500
    %2416 = vmatprep.subr.mxu0 0.0
    %2417 = vmatpush1.msra.mxu0 %v501
    %2418 = vmatprep.subr.mxu0 0.0
    %2419 = vmatpush1.msra.mxu0 %v502
    %2420 = vmatprep.subr.mxu0 0.0
    %2421 = vmatpush1.msra.mxu0 %v503
    %2422 = vmatprep.subr.mxu0 0.0
    %2423 = vmatpush1.msra.mxu0 %v504
    %2424 = vmatprep.subr.mxu0 0.0
    %2425 = vmatpush1.msra.mxu0 %v505
    %2426 = vmatprep.subr.mxu0 0.0
    %2427 = vmatpush1.msra.mxu0 %v506
    %2428 = vmatprep.subr.mxu0 0.0
    %2429 = vmatpush1.msra.mxu0 %v507
    %2430 = vmatprep.subr.mxu0 0.0
    %2431 = vmatpush1.msra.mxu0 %v508
    %2432 = vmatprep.subr.mxu0 0.0
    %2433 = vmatpush1.msra.mxu0 %v509
    %2434 = vmatprep.subr.mxu0 0.0
    %2435 = vmatpush1.msra.mxu0 %v510
    %2436 = vmatprep.subr.mxu0 0.0
    %2437 = vmatpush1.msra.mxu0 %v511
    %2438 = vmatprep.subr.mxu0 0.0
    %2439 = vmatpush1.msra.mxu0 %v512
    %2440 = vmatprep.subr.mxu0 0.0
    %2441 = vmatpush1.msra.mxu0 %v513
    %2442 = vmatprep.subr.mxu0 0.0
    %2443 = vmatpush1.msra.mxu0 %v514
    %2444 = vmatprep.subr.mxu0 0.0
    %2445 = vmatpush1.msra.mxu0 %v515
    %2446 = vmatprep.subr.mxu0 0.0
    %2447 = vmatpush1.msra.mxu0 %v516
    %2448 = vmatprep.subr.mxu0 0.0
    %2449 = vmatpush1.msra.mxu0 %v517
    %2450 = vmatprep.subr.mxu0 0.0
    %2451 = vmatpush1.msra.mxu0 %v518
    %2452 = vmatprep.subr.mxu0 0.0
    %2453 = vmatpush1.msra.mxu0 %v519
    %2454 = vmatprep.subr.mxu0 0.0
    %2455 = vmatpush1.msra.mxu0 %v520
    %2456 = vmatprep.subr.mxu0 0.0
    %2457 = vmatpush1.msra.mxu0 %v521
    %2458 = vmatprep.subr.mxu0 0.0
    %2459 = vmatpush1.msra.mxu0 %v522
    %2460 = vmatprep.subr.mxu0 0.0
    %2461 = vmatpush1.msra.mxu0 %v523
    %2462 = vmatprep.subr.mxu0 0.0
    %2463 = vmatpush1.msra.mxu0 %v524
    %2464 = vmatprep.mubr.f32.mxu0 %v2397
    %2465 = vmatmul.mubr.f32.gmra.mrb[0].mxu0 %v2396
    %v2466 = vpop.f32.mrb[0].mxu0
    %v2467 = vadd.f32 0.0, %v2466
    %v2468 = vpop.f32.mrb[0].mxu0
    %2469 = vdwg.mxu0
    %2470 = vmatprep.subr.mxu0 0.0
    %2471 = vmatpush1.msra.mxu0 %v525
    %2472 = vmatprep.subr.mxu0 0.0
    %2473 = vmatpush1.msra.mxu0 %v526
    %2474 = vmatprep.subr.mxu0 0.0
    %2475 = vmatpush1.msra.mxu0 %v527
    %2476 = vmatprep.subr.mxu0 0.0
    %2477 = vmatpush1.msra.mxu0 %v528
    %2478 = vmatprep.subr.mxu0 0.0
    %2479 = vmatpush1.msra.mxu0 %v529
    %2480 = vmatprep.subr.mxu0 0.0
    %2481 = vmatpush1.msra.mxu0 %v530
    %2482 = vmatprep.subr.mxu0 0.0
    %2483 = vmatpush1.msra.mxu0 %v531
    %2484 = vmatprep.subr.mxu0 0.0
    %2485 = vmatpush1.msra.mxu0 %v532
    %2486 = vmatprep.subr.mxu0 0.0
    %2487 = vmatpush1.msra.mxu0 %v533
    %2488 = vmatprep.subr.mxu0 0.0
    %2489 = vmatpush1.msra.mxu0 %v534
    %2490 = vmatprep.subr.mxu0 0.0
    %2491 = vmatpush1.msra.mxu0 %v535
    %2492 = vmatprep.subr.mxu0 0.0
    %2493 = vmatpush1.msra.mxu0 %v536
    %2494 = vmatprep.subr.mxu0 0.0
    %2495 = vmatpush1.msra.mxu0 %v537
    %2496 = vmatprep.subr.mxu0 0.0
    %2497 = vmatpush1.msra.mxu0 %v538
    %2498 = vmatprep.subr.mxu0 0.0
    %2499 = vmatpush1.msra.mxu0 %v539
    %2500 = vmatprep.subr.mxu0 0.0
    %2501 = vmatpush1.msra.mxu0 %v540
    %2502 = vmatprep.subr.mxu0 0.0
    %2503 = vmatpush1.msra.mxu0 %v541
    %2504 = vmatprep.subr.mxu0 0.0
    %2505 = vmatpush1.msra.mxu0 %v542
    %2506 = vmatprep.subr.mxu0 0.0
    %2507 = vmatpush1.msra.mxu0 %v543
    %2508 = vmatprep.subr.mxu0 0.0
    %2509 = vmatpush1.msra.mxu0 %v544
    %2510 = vmatprep.subr.mxu0 0.0
    %2511 = vmatpush1.msra.mxu0 %v545
    %2512 = vmatprep.subr.mxu0 0.0
    %2513 = vmatpush1.msra.mxu0 %v546
    %2514 = vmatprep.subr.mxu0 0.0
    %2515 = vmatpush1.msra.mxu0 %v547
    %2516 = vmatprep.subr.mxu0 0.0
    %2517 = vmatpush1.msra.mxu0 %v548
    %2518 = vmatprep.subr.mxu0 0.0
    %2519 = vmatpush1.msra.mxu0 %v549
    %2520 = vmatprep.subr.mxu0 0.0
    %2521 = vmatpush1.msra.mxu0 %v550
    %2522 = vmatprep.subr.mxu0 0.0
    %2523 = vmatpush1.msra.mxu0 %v551
    %2524 = vmatprep.subr.mxu0 0.0
    %2525 = vmatpush1.msra.mxu0 %v552
    %2526 = vmatprep.subr.mxu0 0.0
    %2527 = vmatpush1.msra.mxu0 %v553
    %2528 = vmatprep.subr.mxu0 0.0
    %2529 = vmatpush1.msra.mxu0 %v554
    %2530 = vmatprep.subr.mxu0 0.0
    %2531 = vmatpush1.msra.mxu0 %v555
    %2532 = vmatprep.subr.mxu0 0.0
    %2533 = vmatpush1.msra.mxu0 %v556
    %2534 = vmatprep.mubr.f32.mxu0 %v2399
    %2535 = vmatmul.mubr.f32.gmra.mrb[0].mxu0 %v2398
    %v2536 = vpop.f32.mrb[0].mxu0
    %v2537 = vadd.f32 %v2467, %v2536
    %v2538 = vpop.f32.mrb[0].mxu0
    %2539 = vdwg.mxu0
    %2540 = vmatprep.subr.mxu0 0.0
    %2541 = vmatpush1.msra.mxu0 %v429
    %2542 = vmatprep.subr.mxu0 0.0
    %2543 = vmatpush1.msra.mxu0 %v430
    %2544 = vmatprep.subr.mxu0 0.0
    %2545 = vmatpush1.msra.mxu0 %v431
    %2546 = vmatprep.subr.mxu0 0.0
    %2547 = vmatpush1.msra.mxu0 %v432
    %2548 = vmatprep.subr.mxu0 0.0
    %2549 = vmatpush1.msra.mxu0 %v433
    %2550 = vmatprep.subr.mxu0 0.0
    %2551 = vmatpush1.msra.mxu0 %v434
    %2552 = vmatprep.subr.mxu0 0.0
    %2553 = vmatpush1.msra.mxu0 %v435
    %2554 = vmatprep.subr.mxu0 0.0
    %2555 = vmatpush1.msra.mxu0 %v436
    %2556 = vmatprep.subr.mxu0 0.0
    %2557 = vmatpush1.msra.mxu0 %v437
    %2558 = vmatprep.subr.mxu0 0.0
    %2559 = vmatpush1.msra.mxu0 %v438
    %2560 = vmatprep.subr.mxu0 0.0
    %2561 = vmatpush1.msra.mxu0 %v439
    %2562 = vmatprep.subr.mxu0 0.0
    %2563 = vmatpush1.msra.mxu0 %v440
    %2564 = vmatprep.subr.mxu0 0.0
    %2565 = vmatpush1.msra.mxu0 %v441
    %2566 = vmatprep.subr.mxu0 0.0
    %2567 = vmatpush1.msra.mxu0 %v442
    %2568 = vmatprep.subr.mxu0 0.0
    %2569 = vmatpush1.msra.mxu0 %v443
    %2570 = vmatprep.subr.mxu0 0.0
    %2571 = vmatpush1.msra.mxu0 %v444
    %2572 = vmatprep.subr.mxu0 0.0
    %2573 = vmatpush1.msra.mxu0 %v445
    %2574 = vmatprep.subr.mxu0 0.0
    %2575 = vmatpush1.msra.mxu0 %v446
    %2576 = vmatprep.subr.mxu0 0.0
    %2577 = vmatpush1.msra.mxu0 %v447
    %2578 = vmatprep.subr.mxu0 0.0
    %2579 = vmatpush1.msra.mxu0 %v448
    %2580 = vmatprep.subr.mxu0 0.0
    %2581 = vmatpush1.msra.mxu0 %v449
    %2582 = vmatprep.subr.mxu0 0.0
    %2583 = vmatpush1.msra.mxu0 %v450
    %2584 = vmatprep.subr.mxu0 0.0
    %2585 = vmatpush1.msra.mxu0 %v451
    %2586 = vmatprep.subr.mxu0 0.0
    %2587 = vmatpush1.msra.mxu0 %v452
    %2588 = vmatprep.subr.mxu0 0.0
    %2589 = vmatpush1.msra.mxu0 %v453
    %2590 = vmatprep.subr.mxu0 0.0
    %2591 = vmatpush1.msra.mxu0 %v454
    %2592 = vmatprep.subr.mxu0 0.0
    %2593 = vmatpush1.msra.mxu0 %v455
    %2594 = vmatprep.subr.mxu0 0.0
    %2595 = vmatpush1.msra.mxu0 %v456
    %2596 = vmatprep.subr.mxu0 0.0
    %2597 = vmatpush1.msra.mxu0 %v457
    %2598 = vmatprep.subr.mxu0 0.0
    %2599 = vmatpush1.msra.mxu0 %v458
    %2600 = vmatprep.subr.mxu0 0.0
    %2601 = vmatpush1.msra.mxu0 %v459
    %2602 = vmatprep.subr.mxu0 0.0
    %2603 = vmatpush1.msra.mxu0 %v460
    %2604 = vmatprep.mubr.f32.mxu0 %v2009
    %2605 = vmatmul.mubr.f32.gmra.mrb[0].mxu0 %v2008
    %v2606 = vpop.f32.mrb[0].mxu0
    %v2607 = vadd.f32 %v2537, %v2606
    %v2608 = vpop.f32.mrb[0].mxu0
    %2609 = vdwg.mxu0
    %2610 = vmatprep.subr.mxu0 0.0
    %2611 = vmatpush1.msra.mxu0 %v461
    %2612 = vmatprep.subr.mxu0 0.0
    %2613 = vmatpush1.msra.mxu0 %v462
    %2614 = vmatprep.subr.mxu0 0.0
    %2615 = vmatpush1.msra.mxu0 %v463
    %2616 = vmatprep.subr.mxu0 0.0
    %2617 = vmatpush1.msra.mxu0 %v464
    %2618 = vmatprep.subr.mxu0 0.0
    %2619 = vmatpush1.msra.mxu0 %v465
    %2620 = vmatprep.subr.mxu0 0.0
    %2621 = vmatpush1.msra.mxu0 %v466
    %2622 = vmatprep.subr.mxu0 0.0
    %2623 = vmatpush1.msra.mxu0 %v467
    %2624 = vmatprep.subr.mxu0 0.0
    %2625 = vmatpush1.msra.mxu0 %v468
    %2626 = vmatprep.subr.mxu0 0.0
    %2627 = vmatpush1.msra.mxu0 %v469
    %2628 = vmatprep.subr.mxu0 0.0
    %2629 = vmatpush1.msra.mxu0 %v470
    %2630 = vmatprep.subr.mxu0 0.0
    %2631 = vmatpush1.msra.mxu0 %v471
    %2632 = vmatprep.subr.mxu0 0.0
    %2633 = vmatpush1.msra.mxu0 %v472
    %2634 = vmatprep.subr.mxu0 0.0
    %2635 = vmatpush1.msra.mxu0 %v473
    %2636 = vmatprep.subr.mxu0 0.0
    %2637 = vmatpush1.msra.mxu0 %v474
    %2638 = vmatprep.subr.mxu0 0.0
    %2639 = vmatpush1.msra.mxu0 %v475
    %2640 = vmatprep.subr.mxu0 0.0
    %2641 = vmatpush1.msra.mxu0 %v476
    %2642 = vmatprep.subr.mxu0 0.0
    %2643 = vmatpush1.msra.mxu0 %v477
    %2644 = vmatprep.subr.mxu0 0.0
    %2645 = vmatpush1.msra.mxu0 %v478
    %2646 = vmatprep.subr.mxu0 0.0
    %2647 = vmatpush1.msra.mxu0 %v479
    %2648 = vmatprep.subr.mxu0 0.0
    %2649 = vmatpush1.msra.mxu0 %v480
    %2650 = vmatprep.subr.mxu0 0.0
    %2651 = vmatpush1.msra.mxu0 %v481
    %2652 = vmatprep.subr.mxu0 0.0
    %2653 = vmatpush1.msra.mxu0 %v482
    %2654 = vmatprep.subr.mxu0 0.0
    %2655 = vmatpush1.msra.mxu0 %v483
    %2656 = vmatprep.subr.mxu0 0.0
    %2657 = vmatpush1.msra.mxu0 %v484
    %2658 = vmatprep.subr.mxu0 0.0
    %2659 = vmatpush1.msra.mxu0 %v485
    %2660 = vmatprep.subr.mxu0 0.0
    %2661 = vmatpush1.msra.mxu0 %v486
    %2662 = vmatprep.subr.mxu0 0.0
    %2663 = vmatpush1.msra.mxu0 %v487
    %2664 = vmatprep.subr.mxu0 0.0
    %2665 = vmatpush1.msra.mxu0 %v488
    %2666 = vmatprep.subr.mxu0 0.0
    %2667 = vmatpush1.msra.mxu0 %v489
    %2668 = vmatprep.subr.mxu0 0.0
    %2669 = vmatpush1.msra.mxu0 %v490
    %2670 = vmatprep.subr.mxu0 0.0
    %2671 = vmatpush1.msra.mxu0 %v491
    %2672 = vmatprep.subr.mxu0 0.0
    %2673 = vmatpush1.msra.mxu0 %v492
    %2674 = vmatprep.mubr.f32.mxu0 %v2011
    %2675 = vmatmul.mubr.f32.gmra.mrb[0].mxu0 %v2010
    %v2676 = vpop.f32.mrb[0].mxu0
    %v2677 = vadd.f32 %v2607, %v2676
    %v2678 = vpop.f32.mrb[0].mxu0
    %2679 = vdwg.mxu0
    %v2680 = vadd.f32 %v2677, %v1302
    %v2681 = vxor.u32 %v2680, 2147483648
    %v2682 = vmul.f32 %v2681, 1.442695
    %v2683 = vpow.pop %v2682
    %v2684 = vadd.f32 %v2683, 1.0
    %v2685 = vrcp.pop %v2684
    %v2686 = vmul.f32 1.0, %v2685
    %2688 = vset.pattern.permute.xlu0 0
    %2689 = vperm.xlu0 %2688, %v2686
    %v2690 = vpop.permute.xlu0 %2689
    %v2692 = vmul.f32 %v2396, %v2690
    %v2693 = vmul.f32 %v2397, %v2690
    %v2694 = vmul.f32 %v2398, %v2690
    %v2695 = vmul.f32 %v2399, %v2690
    %v2696 = vsub.f32 %v2008, %v2692
    %v2697 = vsub.f32 %v2009, %v2693
    %v2698 = vsub.f32 %v2010, %v2694
    %v2699 = vsub.f32 %v2011, %v2695
    %2700 = vst [vmem:[#allocation4] sm:$0xff] %v2696
    %2701 = vst [vmem:[#allocation4 + $0x8] sm:$0xff] %v2697
    %2702 = vst [vmem:[#allocation4 + $0x10] sm:$0xff] %v2698
    %2703 = vst [vmem:[#allocation4 + $0x18] sm:$0xff] %v2699
    // Predicated region
    $region38: #{cdnet_forward.1} parent=1 // pred_check
      _
    $region39: #{cdnet_forward.1} parent=1 // pred_check_branch
      %2705 = sbr.rel (0) target = $region41
    $region40: #{cdnet_forward.1} parent=1 // pred_region
      %s2707 = ssub.s32 512, 512
      %2708 = vsyncadd [#allocation5], %s2707
      %s2710 = sshll.u32 [#allocation4], 4
      %s2711 = int_to_ptr.vmem [resolvable:$true] %s2710
      %2713 = dma.vmem_to_hbm [thread:$0]  %s2711, 512, %s9, [#allocation5]
    $region41: #{cdnet_forward.1} parent=1 // pred_fallthru
      _
    // Predicated region
    $region42: #{cdnet_forward.1} parent=1 // pred_check
      _
    $region43: #{cdnet_forward.1} parent=1 // pred_check_branch
      %2715 = sbr.rel (0) target = $region45
    $region44: #{cdnet_forward.1} parent=1 // pred_region
      %2716 = dma.done [#allocation5], 512
    $region45: #{cdnet_forward.1} parent=1 // pred_fallthru
      _
    %2717 = vsyncpa [#allocation5], 1

</llo_original>
